<compile_context>
chip_gen: v6e
topology: v6e:2x2x1
jax: 0.10.0
libtpu: 0.0.40
codegen_flags: <defaults>
</compile_context>

<pallas_src>
import functools

import numpy as np
import jax
import jax.numpy as jnp
from jax.experimental import pallas as pl
from jax.experimental.pallas import tpu as pltpu

# ----------------------------- config -----------------------------
BATCH = 2
C_IN = 3
H = W = 16
C_MLP = 32          # dim_mlp (encoder feature width)
DIM = 32            # BYOL `dim`
MOMENTUM = 0.99

KPAD = 128          # im2col contraction dim (9 * C_IN = 27) padded to 128 lanes
FPAD = 128          # all feature dims padded to 128 lanes (lane-dense)
HW = H * W
M_ROWS = BATCH * HW                 # rows of the im2col slab per branch

assert 9 * C_IN <= KPAD
assert C_MLP <= FPAD and DIM <= FPAD
assert M_ROWS % 8 == 0

_VMEM = pltpu.MemorySpace.VMEM


# ----------------------------- fused kernel -----------------------------
def _byol_fused_kernel(xq_ref, xk_ref, pool_ref,
                       wcq_ref, w1q_ref, b1q_ref, w2q_ref, b2q_ref,
                       wck_ref, w1k_ref, b1k_ref, w2k_ref, b2k_ref,
                       loss_ref, wck_o, w1k_o, b1k_o, w2k_o, b2k_o,
                       *, m, batch):
    one_m = 1.0 - m

    # Query params loaded ONCE (reused by momentum update and query branch).
    wcq = wcq_ref[...]
    w1q = w1q_ref[...]
    b1q = b1q_ref[...]
    w2q = w2q_ref[...]
    b2q = b2q_ref[...]

    # ---- momentum update (exact f32): param_k = m*param_k + (1-m)*param_q ----
    wck = wck_ref[...] * m + wcq * one_m
    w1k = w1k_ref[...] * m + w1q * one_m
    b1k = b1k_ref[...] * m + b1q * one_m
    w2k = w2k_ref[...] * m + w2q * one_m
    b2k = b2k_ref[...] * m + b2q * one_m
    wck_o[...] = wck
    w1k_o[...] = w1k
    b1k_o[...] = b1k
    w2k_o[...] = w2k
    b2k_o[...] = b2k

    pool = pool_ref[...]            # [B, M_ROWS] f32, 1/HW at own-image rows

    def encode(x_bf16, wc, w1, b1, w2, b2):
        # conv3x3 as ONE im2col matmul (bf16 operands, f32 accumulation).
        acc = jnp.dot(x_bf16, wc.astype(jnp.bfloat16),
                      preferred_element_type=jnp.float32)        # [M, FPAD] f32
        acc = jnp.maximum(acc, 0.0)                               # ReLU
        # Global average pool via a tiny f32 MXU matmul.
        pooled = jnp.dot(pool, acc,
                         preferred_element_type=jnp.float32)     # [B, FPAD] f32
        # fc = Linear -> ReLU -> Linear (bf16 matmuls, f32 accum, f32 bias add)
        hid = jnp.dot(pooled.astype(jnp.bfloat16), w1.astype(jnp.bfloat16),
                      preferred_element_type=jnp.float32) + b1
        hid = jnp.maximum(hid, 0.0)
        return jnp.dot(hid.astype(jnp.bfloat16), w2.astype(jnp.bfloat16),
                       preferred_element_type=jnp.float32) + b2

    # Query branch (predictor = Identity) with query params.
    z1 = encode(xq_ref[...], wcq, w1q, b1q, w2q, b2q)
    # Key branch with the freshly momentum-updated key params (detached: fwd only).
    z2 = encode(xk_ref[...], wck, w1k, b1k, w2k, b2k)

    # loss = -mean(cosine_similarity(q1, z2, dim=1)) * 0.5
    eps = 1e-8
    dots = jnp.sum(z1 * z2, axis=1, keepdims=True)                   # [B,1]
    n1 = jnp.sqrt(jnp.sum(z1 * z1, axis=1, keepdims=True))           # [B,1]
    n2 = jnp.sqrt(jnp.sum(z2 * z2, axis=1, keepdims=True))           # [B,1]
    cos = dots / (jnp.maximum(n1, eps) * jnp.maximum(n2, eps))       # [B,1]
    loss_11 = -(jnp.sum(cos, axis=0, keepdims=True) / batch) * 0.5   # [1,1]
    loss_ref[...] = jnp.broadcast_to(loss_11, loss_ref.shape)        # lane-dense


# ----------------------------- wrapper glue -----------------------------
def _im2col_slab(im_nchw):
    """NCHW image -> im2col slab [B*H*W, KPAD] bf16 (3x3, stride 1, pad 1)."""
    b, c, h, w = im_nchw.shape
    x = jnp.transpose(im_nchw, (0, 2, 3, 1))                        # NHWC
    xp = jnp.pad(x, ((0, 0), (1, 1), (1, 1), (0, 0)))               # [B,H+2,W+2,C]
    taps = [xp[:, dy:dy + h, dx:dx + w, :]
            for dy in range(3) for dx in range(3)]                  # 9 x [B,H,W,C]
    slab = jnp.concatenate(taps, axis=-1).reshape(b * h * w, 9 * c) # [M, 27]
    slab = jnp.pad(slab, ((0, 0), (0, KPAD - 9 * c)))               # [M, 128]
    return slab.astype(jnp.bfloat16)


def _make_pool_matrix():
    """[B, M_ROWS] matrix: 1/HW at the rows belonging to each image."""
    pmat = np.zeros((BATCH, M_ROWS), np.float32)
    for b in range(BATCH):
        pmat[b, b * HW:(b + 1) * HW] = 1.0 / HW
    return jnp.asarray(pmat)


_PARAM_NAMES = ("wconv", "w1", "b1", "w2", "b2")


@functools.partial(jax.jit, static_argnums=(4,), donate_argnums=(3,))
def byol_forward(im_q, im_k, params_q, params_k, m):
    xq = _im2col_slab(im_q)
    xk = _im2col_slab(im_k)
    pool = _make_pool_matrix()

    q = [params_q[n] for n in _PARAM_NAMES]
    k = [params_k[n] for n in _PARAM_NAMES]

    out_shape = (jax.ShapeDtypeStruct((1, FPAD), jnp.float32),) + tuple(
        jax.ShapeDtypeStruct(a.shape, a.dtype) for a in k)

    outs = pl.pallas_call(
        functools.partial(_byol_fused_kernel, m=m, batch=im_q.shape[0]),
        out_shape=out_shape,
        in_specs=[pl.BlockSpec(memory_space=_VMEM)] * 13,
        out_specs=tuple([pl.BlockSpec(memory_space=_VMEM)] * 6),
        # Update key params in place (HBM buffers of the donated k inputs reused).
        input_output_aliases={8: 1, 9: 2, 10: 3, 11: 4, 12: 5},
    )(xq, xk, pool, *q, *k)

    loss = outs[0][0, 0]
    params_k_new = dict(zip(_PARAM_NAMES, outs[1:]))
    return loss, params_k_new


# ----------------------------- param init -----------------------------
def init_encoder_params(key):
    k1, k2, k3, k4, k5 = jax.random.split(key, 5)
    # Conv weight in (ky, kx, cin, cout) order, flattened to [9*C_IN, C_MLP] and
    # zero-padded to [KPAD, FPAD] to match the im2col tap layout.
    # (PyTorch conv weights are [cout, cin, kh, kw]; loading real weights would
    #  need .permute(2, 3, 1, 0).reshape(9*C_IN, C_MLP).)
    wconv = jax.random.normal(k1, (3, 3, C_IN, C_MLP), jnp.float32) * 0.1
    wconv = wconv.reshape(9 * C_IN, C_MLP)
    wconv = jnp.pad(wconv, ((0, KPAD - 9 * C_IN), (0, FPAD - C_MLP)))
    w1 = jnp.pad(jax.random.normal(k2, (C_MLP, C_MLP), jnp.float32) * 0.1,
                 ((0, FPAD - C_MLP), (0, FPAD - C_MLP)))
    b1 = jnp.pad(jax.random.normal(k3, (1, C_MLP), jnp.float32) * 0.01,
                 ((0, 0), (0, FPAD - C_MLP)))
    w2 = jnp.pad(jax.random.normal(k4, (C_MLP, DIM), jnp.float32) * 0.1,
                 ((0, FPAD - C_MLP), (0, FPAD - DIM)))
    b2 = jnp.pad(jax.random.normal(k5, (1, DIM), jnp.float32) * 0.01,
                 ((0, 0), (0, FPAD - DIM)))
    return {"wconv": wconv, "w1": w1, "b1": b1, "w2": w2, "b2": b2}


# ----------------------------- main -----------------------------
if __name__ == "__main__":
    root = jax.random.PRNGKey(0)
    k_img_q, k_img_k, k_params = jax.random.split(root, 3)

    im_q = jax.random.normal(k_img_q, (BATCH, C_IN, H, W), jnp.float32)
    im_k = jax.random.normal(k_img_k, (BATCH, C_IN, H, W), jnp.float32)

    params_q = init_encoder_params(k_params)
    # encoder_k = copy.deepcopy(encoder_q)
    params_k = {name: jnp.array(v) for name, v in params_q.items()}

    loss, params_k = byol_forward(im_q, im_k, params_q, params_k, MOMENTUM)
    jax.block_until_ready(loss)
    print("KERNEL_OK")
</pallas_src>

<mosaic_0001>
module attributes {stable_mosaic.version = 11 : i64} {
  func.func @_byol_fused_kernel(%arg0: memref<512x128xbf16, #tpu.memory_space<vmem>>, %arg1: memref<512x128xbf16, #tpu.memory_space<vmem>>, %arg2: memref<2x512xf32, #tpu.memory_space<vmem>>, %arg3: memref<128x128xf32, #tpu.memory_space<vmem>>, %arg4: memref<128x128xf32, #tpu.memory_space<vmem>>, %arg5: memref<1x128xf32, #tpu.memory_space<vmem>>, %arg6: memref<128x128xf32, #tpu.memory_space<vmem>>, %arg7: memref<1x128xf32, #tpu.memory_space<vmem>>, %arg8: memref<128x128xf32, #tpu.memory_space<vmem>>, %arg9: memref<128x128xf32, #tpu.memory_space<vmem>>, %arg10: memref<1x128xf32, #tpu.memory_space<vmem>>, %arg11: memref<128x128xf32, #tpu.memory_space<vmem>>, %arg12: memref<1x128xf32, #tpu.memory_space<vmem>>, %arg13: memref<1x128xf32, #tpu.memory_space<vmem>>, %arg14: memref<128x128xf32, #tpu.memory_space<vmem>>, %arg15: memref<128x128xf32, #tpu.memory_space<vmem>>, %arg16: memref<1x128xf32, #tpu.memory_space<vmem>>, %arg17: memref<128x128xf32, #tpu.memory_space<vmem>>, %arg18: memref<1x128xf32, #tpu.memory_space<vmem>>) attributes {dimension_semantics = [], scalar_prefetch = 0 : i64, scratch_operands = 0 : i64, tpu.core_type = #tpu.core_type<tc>} {
    %c0 = arith.constant 0 : index
    %c0_0 = arith.constant 0 : index
    %0 = vector.load %arg3[%c0, %c0_0] : memref<128x128xf32, #tpu.memory_space<vmem>>, vector<128x128xf32>
    %c0_1 = arith.constant 0 : index
    %c0_2 = arith.constant 0 : index
    %1 = vector.load %arg4[%c0_1, %c0_2] : memref<128x128xf32, #tpu.memory_space<vmem>>, vector<128x128xf32>
    %c0_3 = arith.constant 0 : index
    %c0_4 = arith.constant 0 : index
    %2 = vector.load %arg5[%c0_3, %c0_4] : memref<1x128xf32, #tpu.memory_space<vmem>>, vector<1x128xf32>
    %c0_5 = arith.constant 0 : index
    %c0_6 = arith.constant 0 : index
    %3 = vector.load %arg6[%c0_5, %c0_6] : memref<128x128xf32, #tpu.memory_space<vmem>>, vector<128x128xf32>
    %c0_7 = arith.constant 0 : index
    %c0_8 = arith.constant 0 : index
    %4 = vector.load %arg7[%c0_7, %c0_8] : memref<1x128xf32, #tpu.memory_space<vmem>>, vector<1x128xf32>
    %c0_9 = arith.constant 0 : index
    %c0_10 = arith.constant 0 : index
    %5 = vector.load %arg8[%c0_9, %c0_10] : memref<128x128xf32, #tpu.memory_space<vmem>>, vector<128x128xf32>
    %cst = arith.constant 9.900000e-01 : f32
    %6 = vector.broadcast %cst : f32 to vector<128x128xf32>
    %7 = arith.mulf %5, %6 : vector<128x128xf32>
    %cst_11 = arith.constant 0.00999999977 : f32
    %8 = vector.broadcast %cst_11 : f32 to vector<128x128xf32>
    %9 = arith.mulf %0, %8 : vector<128x128xf32>
    %10 = arith.addf %7, %9 : vector<128x128xf32>
    %c0_12 = arith.constant 0 : index
    %c0_13 = arith.constant 0 : index
    %11 = vector.load %arg9[%c0_12, %c0_13] : memref<128x128xf32, #tpu.memory_space<vmem>>, vector<128x128xf32>
    %cst_14 = arith.constant 9.900000e-01 : f32
    %12 = vector.broadcast %cst_14 : f32 to vector<128x128xf32>
    %13 = arith.mulf %11, %12 : vector<128x128xf32>
    %cst_15 = arith.constant 0.00999999977 : f32
    %14 = vector.broadcast %cst_15 : f32 to vector<128x128xf32>
    %15 = arith.mulf %1, %14 : vector<128x128xf32>
    %16 = arith.addf %13, %15 : vector<128x128xf32>
    %c0_16 = arith.constant 0 : index
    %c0_17 = arith.constant 0 : index
    %17 = vector.load %arg10[%c0_16, %c0_17] : memref<1x128xf32, #tpu.memory_space<vmem>>, vector<1x128xf32>
    %cst_18 = arith.constant 9.900000e-01 : f32
    %18 = vector.broadcast %cst_18 : f32 to vector<1x128xf32>
    %19 = arith.mulf %17, %18 : vector<1x128xf32>
    %cst_19 = arith.constant 0.00999999977 : f32
    %20 = vector.broadcast %cst_19 : f32 to vector<1x128xf32>
    %21 = arith.mulf %2, %20 : vector<1x128xf32>
    %22 = arith.addf %19, %21 : vector<1x128xf32>
    %c0_20 = arith.constant 0 : index
    %c0_21 = arith.constant 0 : index
    %23 = vector.load %arg11[%c0_20, %c0_21] : memref<128x128xf32, #tpu.memory_space<vmem>>, vector<128x128xf32>
    %cst_22 = arith.constant 9.900000e-01 : f32
    %24 = vector.broadcast %cst_22 : f32 to vector<128x128xf32>
    %25 = arith.mulf %23, %24 : vector<128x128xf32>
    %cst_23 = arith.constant 0.00999999977 : f32
    %26 = vector.broadcast %cst_23 : f32 to vector<128x128xf32>
    %27 = arith.mulf %3, %26 : vector<128x128xf32>
    %28 = arith.addf %25, %27 : vector<128x128xf32>
    %c0_24 = arith.constant 0 : index
    %c0_25 = arith.constant 0 : index
    %29 = vector.load %arg12[%c0_24, %c0_25] : memref<1x128xf32, #tpu.memory_space<vmem>>, vector<1x128xf32>
    %cst_26 = arith.constant 9.900000e-01 : f32
    %30 = vector.broadcast %cst_26 : f32 to vector<1x128xf32>
    %31 = arith.mulf %29, %30 : vector<1x128xf32>
    %cst_27 = arith.constant 0.00999999977 : f32
    %32 = vector.broadcast %cst_27 : f32 to vector<1x128xf32>
    %33 = arith.mulf %4, %32 : vector<1x128xf32>
    %34 = arith.addf %31, %33 : vector<1x128xf32>
    %c0_28 = arith.constant 0 : index
    %c0_29 = arith.constant 0 : index
    %35 = vector.load %arg14[%c0_28, %c0_29] : memref<128x128xf32, #tpu.memory_space<vmem>>, vector<128x128xf32>
    tpu.vector_store %arg14[%c0_28, %c0_29], %10 {strides = array<i32>} : memref<128x128xf32, #tpu.memory_space<vmem>>, vector<128x128xf32>,
    %c0_30 = arith.constant 0 : index
    %c0_31 = arith.constant 0 : index
    %36 = vector.load %arg15[%c0_30, %c0_31] : memref<128x128xf32, #tpu.memory_space<vmem>>, vector<128x128xf32>
    tpu.vector_store %arg15[%c0_30, %c0_31], %16 {strides = array<i32>} : memref<128x128xf32, #tpu.memory_space<vmem>>, vector<128x128xf32>,
    %c0_32 = arith.constant 0 : index
    %c0_33 = arith.constant 0 : index
    %37 = vector.load %arg16[%c0_32, %c0_33] : memref<1x128xf32, #tpu.memory_space<vmem>>, vector<1x128xf32>
    tpu.vector_store %arg16[%c0_32, %c0_33], %22 {strides = array<i32>} : memref<1x128xf32, #tpu.memory_space<vmem>>, vector<1x128xf32>,
    %c0_34 = arith.constant 0 : index
    %c0_35 = arith.constant 0 : index
    %38 = vector.load %arg17[%c0_34, %c0_35] : memref<128x128xf32, #tpu.memory_space<vmem>>, vector<128x128xf32>
    tpu.vector_store %arg17[%c0_34, %c0_35], %28 {strides = array<i32>} : memref<128x128xf32, #tpu.memory_space<vmem>>, vector<128x128xf32>,
    %c0_36 = arith.constant 0 : index
    %c0_37 = arith.constant 0 : index
    %39 = vector.load %arg18[%c0_36, %c0_37] : memref<1x128xf32, #tpu.memory_space<vmem>>, vector<1x128xf32>
    tpu.vector_store %arg18[%c0_36, %c0_37], %34 {strides = array<i32>} : memref<1x128xf32, #tpu.memory_space<vmem>>, vector<1x128xf32>,
    %c0_38 = arith.constant 0 : index
    %c0_39 = arith.constant 0 : index
    %40 = vector.load %arg2[%c0_38, %c0_39] : memref<2x512xf32, #tpu.memory_space<vmem>>, vector<2x512xf32>
    %c0_40 = arith.constant 0 : index
    %c0_41 = arith.constant 0 : index
    %41 = vector.load %arg0[%c0_40, %c0_41] : memref<512x128xbf16, #tpu.memory_space<vmem>>, vector<512x128xbf16>
    %42 = arith.truncf %0 : vector<128x128xf32> to vector<128x128xbf16>
    %cst_42 = arith.constant dense<0.000000e+00> : vector<512x128xf32>
    %43 = tpu.matmul %41, %42, %cst_42 {dimension_numbers = #tpu.dot_dimension_numbers<[1], [0], [0], [1], [0, 0, 1, 1], [], []>} : vector<512x128xbf16>, vector<128x128xbf16>, vector<512x128xf32> -> vector<512x128xf32>
    %cst_43 = arith.constant 0.000000e+00 : f32
    %44 = vector.broadcast %cst_43 : f32 to vector<512x128xf32>
    %45 = arith.maximumf %43, %44 : vector<512x128xf32>
    %cst_44 = arith.constant dense<0.000000e+00> : vector<2x128xf32>
    %46 = tpu.matmul %40, %45, %cst_44 {dimension_numbers = #tpu.dot_dimension_numbers<[1], [0], [0], [1], [0, 0, 1, 1], [], []>} : vector<2x512xf32>, vector<512x128xf32>, vector<2x128xf32> -> vector<2x128xf32>
    %47 = arith.truncf %46 : vector<2x128xf32> to vector<2x128xbf16>
    %48 = arith.truncf %1 : vector<128x128xf32> to vector<128x128xbf16>
    %cst_45 = arith.constant dense<0.000000e+00> : vector<2x128xf32>
    %49 = tpu.matmul %47, %48, %cst_45 {dimension_numbers = #tpu.dot_dimension_numbers<[1], [0], [0], [1], [0, 0, 1, 1], [], []>} : vector<2x128xbf16>, vector<128x128xbf16>, vector<2x128xf32> -> vector<2x128xf32>
    %50 = vector.broadcast %2 : vector<1x128xf32> to vector<2x128xf32>
    %51 = arith.addf %49, %50 : vector<2x128xf32>
    %cst_46 = arith.constant 0.000000e+00 : f32
    %52 = vector.broadcast %cst_46 : f32 to vector<2x128xf32>
    %53 = arith.maximumf %51, %52 : vector<2x128xf32>
    %54 = arith.truncf %53 : vector<2x128xf32> to vector<2x128xbf16>
    %55 = arith.truncf %3 : vector<128x128xf32> to vector<128x128xbf16>
    %cst_47 = arith.constant dense<0.000000e+00> : vector<2x128xf32>
    %56 = tpu.matmul %54, %55, %cst_47 {dimension_numbers = #tpu.dot_dimension_numbers<[1], [0], [0], [1], [0, 0, 1, 1], [], []>} : vector<2x128xbf16>, vector<128x128xbf16>, vector<2x128xf32> -> vector<2x128xf32>
    %57 = vector.broadcast %4 : vector<1x128xf32> to vector<2x128xf32>
    %58 = arith.addf %56, %57 : vector<2x128xf32>
    %c0_48 = arith.constant 0 : index
    %c0_49 = arith.constant 0 : index
    %59 = vector.load %arg1[%c0_48, %c0_49] : memref<512x128xbf16, #tpu.memory_space<vmem>>, vector<512x128xbf16>
    %60 = arith.truncf %10 : vector<128x128xf32> to vector<128x128xbf16>
    %cst_50 = arith.constant dense<0.000000e+00> : vector<512x128xf32>
    %61 = tpu.matmul %59, %60, %cst_50 {dimension_numbers = #tpu.dot_dimension_numbers<[1], [0], [0], [1], [0, 0, 1, 1], [], []>} : vector<512x128xbf16>, vector<128x128xbf16>, vector<512x128xf32> -> vector<512x128xf32>
    %cst_51 = arith.constant 0.000000e+00 : f32
    %62 = vector.broadcast %cst_51 : f32 to vector<512x128xf32>
    %63 = arith.maximumf %61, %62 : vector<512x128xf32>
    %cst_52 = arith.constant dense<0.000000e+00> : vector<2x128xf32>
    %64 = tpu.matmul %40, %63, %cst_52 {dimension_numbers = #tpu.dot_dimension_numbers<[1], [0], [0], [1], [0, 0, 1, 1], [], []>} : vector<2x512xf32>, vector<512x128xf32>, vector<2x128xf32> -> vector<2x128xf32>
    %65 = arith.truncf %64 : vector<2x128xf32> to vector<2x128xbf16>
    %66 = arith.truncf %16 : vector<128x128xf32> to vector<128x128xbf16>
    %cst_53 = arith.constant dense<0.000000e+00> : vector<2x128xf32>
    %67 = tpu.matmul %65, %66, %cst_53 {dimension_numbers = #tpu.dot_dimension_numbers<[1], [0], [0], [1], [0, 0, 1, 1], [], []>} : vector<2x128xbf16>, vector<128x128xbf16>, vector<2x128xf32> -> vector<2x128xf32>
    %68 = vector.broadcast %22 : vector<1x128xf32> to vector<2x128xf32>
    %69 = arith.addf %67, %68 : vector<2x128xf32>
    %cst_54 = arith.constant 0.000000e+00 : f32
    %70 = vector.broadcast %cst_54 : f32 to vector<2x128xf32>
    %71 = arith.maximumf %69, %70 : vector<2x128xf32>
    %72 = arith.truncf %71 : vector<2x128xf32> to vector<2x128xbf16>
    %73 = arith.truncf %28 : vector<128x128xf32> to vector<128x128xbf16>
    %cst_55 = arith.constant dense<0.000000e+00> : vector<2x128xf32>
    %74 = tpu.matmul %72, %73, %cst_55 {dimension_numbers = #tpu.dot_dimension_numbers<[1], [0], [0], [1], [0, 0, 1, 1], [], []>} : vector<2x128xbf16>, vector<128x128xbf16>, vector<2x128xf32> -> vector<2x128xf32>
    %75 = vector.broadcast %34 : vector<1x128xf32> to vector<2x128xf32>
    %76 = arith.addf %74, %75 : vector<2x128xf32>
    %77 = arith.mulf %58, %76 : vector<2x128xf32>
    %cst_56 = arith.constant dense<0.000000e+00> : vector<2xf32>
    %78 = vector.multi_reduction <add>, %77, %cst_56 [1] : vector<2x128xf32> to vector<2xf32>
    %79 = vector.shape_cast %78 : vector<2xf32> to vector<2x1xf32>
    %80 = arith.mulf %58, %58 : vector<2x128xf32>
    %cst_57 = arith.constant dense<0.000000e+00> : vector<2xf32>
    %81 = vector.multi_reduction <add>, %80, %cst_57 [1] : vector<2x128xf32> to vector<2xf32>
    %82 = vector.shape_cast %81 : vector<2xf32> to vector<2x1xf32>
    %83 = math.sqrt %82 : vector<2x1xf32>
    %84 = arith.mulf %76, %76 : vector<2x128xf32>
    %cst_58 = arith.constant dense<0.000000e+00> : vector<2xf32>
    %85 = vector.multi_reduction <add>, %84, %cst_58 [1] : vector<2x128xf32> to vector<2xf32>
    %86 = vector.shape_cast %85 : vector<2xf32> to vector<2x1xf32>
    %87 = math.sqrt %86 : vector<2x1xf32>
    %cst_59 = arith.constant 9.99999993E-9 : f32
    %88 = vector.broadcast %cst_59 : f32 to vector<2x1xf32>
    %89 = arith.maximumf %83, %88 : vector<2x1xf32>
    %cst_60 = arith.constant 9.99999993E-9 : f32
    %90 = vector.broadcast %cst_60 : f32 to vector<2x1xf32>
    %91 = arith.maximumf %87, %90 : vector<2x1xf32>
    %92 = arith.mulf %89, %91 : vector<2x1xf32>
    %93 = arith.divf %79, %92 : vector<2x1xf32>
    %cst_61 = arith.constant dense<0.000000e+00> : vector<1xf32>
    %94 = vector.multi_reduction <add>, %93, %cst_61 [0] : vector<2x1xf32> to vector<1xf32>
    %95 = vector.shape_cast %94 : vector<1xf32> to vector<1x1xf32>
    %cst_62 = arith.constant 2.000000e+00 : f32
    %96 = vector.broadcast %cst_62 : f32 to vector<1x1xf32>
    %97 = arith.divf %95, %96 : vector<1x1xf32>
    %cst_63 = arith.constant 0.000000e+00 : f32
    %98 = vector.broadcast %cst_63 : f32 to vector<1x1xf32>
    %99 = arith.subf %98, %97 : vector<1x1xf32>
    %cst_64 = arith.constant 5.000000e-01 : f32
    %100 = vector.broadcast %cst_64 : f32 to vector<1x1xf32>
    %101 = arith.mulf %99, %100 : vector<1x1xf32>
    %102 = vector.shape_cast %101 : vector<1x1xf32> to vector<1x1xf32>
    %103 = vector.broadcast %102 : vector<1x1xf32> to vector<1x128xf32>
    %c0_65 = arith.constant 0 : index
    %c0_66 = arith.constant 0 : index
    %104 = vector.load %arg13[%c0_65, %c0_66] : memref<1x128xf32, #tpu.memory_space<vmem>>, vector<1x128xf32>
    tpu.vector_store %arg13[%c0_65, %c0_66], %103 {strides = array<i32>} : memref<1x128xf32, #tpu.memory_space<vmem>>, vector<1x128xf32>,
    return
  }
}

</mosaic_0001>

<llo_original>
// kernel: byol_forward.1
$region0: #{byol_forward.1}
  #allocation0 [shape = 'u32[]', space=smem, size = 0x4, offset = 0x4, fixed_abs, tag = 'smem constant byte address 0x4 - core index']
  #allocation1 [shape = 'u32[144,128]{1,0:T(1,128)}', space=vmem, size = 0x12000, scoped, tag = 'internal scratch']
  %s0 = inlined_call_operand.vmem [shape: bf16[512,128], index: 0, kind: input, shape index: {}]
  %s1 = inlined_call_operand.vmem [shape: bf16[512,128], index: 1, kind: input, shape index: {}]
  %s2 = inlined_call_operand.vmem [shape: f32[2,512], index: 2, kind: input, shape index: {}]
  %s3 = inlined_call_operand.vmem [shape: f32[128,128], index: 3, kind: input, shape index: {}]
  %s4 = inlined_call_operand.vmem [shape: f32[128,128], index: 4, kind: input, shape index: {}]
  %s5 = inlined_call_operand.vmem [shape: f32[1,128], index: 5, kind: input, shape index: {}]
  %s6 = inlined_call_operand.vmem [shape: f32[128,128], index: 6, kind: input, shape index: {}]
  %s7 = inlined_call_operand.vmem [shape: f32[1,128], index: 7, kind: input, shape index: {}]
  %s8 = inlined_call_operand.vmem [shape: f32[128,128], index: 8, kind: input, shape index: {}, may-alias: {8,14}]
  %s9 = inlined_call_operand.vmem [shape: f32[128,128], index: 9, kind: input, shape index: {}, may-alias: {9,15}]
  %s10 = inlined_call_operand.vmem [shape: f32[1,128], index: 10, kind: input, shape index: {}, may-alias: {10,16}]
  %s11 = inlined_call_operand.vmem [shape: f32[128,128], index: 11, kind: input, shape index: {}, may-alias: {11,17}]
  %s12 = inlined_call_operand.vmem [shape: f32[1,128], index: 12, kind: input, shape index: {}, may-alias: {12,18}]
  %s13 = inlined_call_operand.hbm [shape: f32[1,128], index: 13, kind: output, shape index: {0}]
  %s14 = inlined_call_operand.vmem [shape: f32[128,128], index: 14, kind: output, shape index: {1}, may-alias: {8,14}]
  %s15 = inlined_call_operand.vmem [shape: f32[128,128], index: 15, kind: output, shape index: {2}, may-alias: {9,15}]
  %s16 = inlined_call_operand.vmem [shape: f32[1,128], index: 16, kind: output, shape index: {3}, may-alias: {10,16}]
  %s17 = inlined_call_operand.vmem [shape: f32[128,128], index: 17, kind: output, shape index: {4}, may-alias: {11,17}]
  %s18 = inlined_call_operand.vmem [shape: f32[1,128], index: 18, kind: output, shape index: {5}, may-alias: {12,18}]
  %19 = xla_tuple %s13, %s14, %s15, %s16, %s17, %s18
  %s20 = sld [smem:[#allocation0]]
  $region102: #{byol_forward.1} parent=0
    _
  %s22 = ssub.s32 1, %s20
  %s23 = scalar_select 0, %s22, %s20
  $region1: #{byol_forward.1} parent=0
    #allocation2 [shape = 'u8[512]{0}', space=vmem, size = 0x400, scoped, tag = 'output window, operand 0, single buffered']
    #allocation3 [shape = 's32[1]{0}', space=sflag, size = 0x4, scoped, tag = 'scoped memory for byol_forward.1']
    %24 = vsyncpa [#allocation3], 0
    // Predicated region
    $region2: #{byol_forward.1} parent=1 // pred_check
      _
    $region3: #{byol_forward.1} parent=1 // pred_check_branch
      %26 = sbr.rel (0) target = $region5
    $region4: #{byol_forward.1} parent=1 // pred_region
      _
    $region5: #{byol_forward.1} parent=1 // pred_fallthru
      _
    // Predicated region
    $region6: #{byol_forward.1} parent=1 // pred_check
      _
    $region7: #{byol_forward.1} parent=1 // pred_check_branch
      %28 = sbr.rel (0) target = $region9
    $region8: #{byol_forward.1} parent=1 // pred_region
      _
    $region9: #{byol_forward.1} parent=1 // pred_fallthru
      _
    // Predicated region
    $region10: #{byol_forward.1} parent=1 // pred_check
      _
    $region11: #{byol_forward.1} parent=1 // pred_check_branch
      %30 = sbr.rel (0) target = $region13
    $region12: #{byol_forward.1} parent=1 // pred_region
      _
    $region13: #{byol_forward.1} parent=1 // pred_fallthru
      _
    // Predicated region
    $region14: #{byol_forward.1} parent=1 // pred_check
      _
    $region15: #{byol_forward.1} parent=1 // pred_check_branch
      %32 = sbr.rel (0) target = $region17
    $region16: #{byol_forward.1} parent=1 // pred_region
      _
    $region17: #{byol_forward.1} parent=1 // pred_fallthru
      _
    // Predicated region
    $region18: #{byol_forward.1} parent=1 // pred_check
      _
    $region19: #{byol_forward.1} parent=1 // pred_check_branch
      %34 = sbr.rel (0) target = $region21
    $region20: #{byol_forward.1} parent=1 // pred_region
      _
    $region21: #{byol_forward.1} parent=1 // pred_fallthru
      _
    // Predicated region
    $region22: #{byol_forward.1} parent=1 // pred_check
      _
    $region23: #{byol_forward.1} parent=1 // pred_check_branch
      %36 = sbr.rel (0) target = $region25
    $region24: #{byol_forward.1} parent=1 // pred_region
      _
    $region25: #{byol_forward.1} parent=1 // pred_fallthru
      _
    // Predicated region
    $region26: #{byol_forward.1} parent=1 // pred_check
      _
    $region27: #{byol_forward.1} parent=1 // pred_check_branch
      %38 = sbr.rel (0) target = $region29
    $region28: #{byol_forward.1} parent=1 // pred_region
      _
    $region29: #{byol_forward.1} parent=1 // pred_fallthru
      _
    // Predicated region
    $region30: #{byol_forward.1} parent=1 // pred_check
      _
    $region31: #{byol_forward.1} parent=1 // pred_check_branch
      %40 = sbr.rel (0) target = $region33
    $region32: #{byol_forward.1} parent=1 // pred_region
      _
    $region33: #{byol_forward.1} parent=1 // pred_fallthru
      _
    // Predicated region
    $region34: #{byol_forward.1} parent=1 // pred_check
      _
    $region35: #{byol_forward.1} parent=1 // pred_check_branch
      %42 = sbr.rel (0) target = $region37
    $region36: #{byol_forward.1} parent=1 // pred_region
      _
    $region37: #{byol_forward.1} parent=1 // pred_fallthru
      _
    // Predicated region
    $region38: #{byol_forward.1} parent=1 // pred_check
      _
    $region39: #{byol_forward.1} parent=1 // pred_check_branch
      %44 = sbr.rel (0) target = $region41
    $region40: #{byol_forward.1} parent=1 // pred_region
      _
    $region41: #{byol_forward.1} parent=1 // pred_fallthru
      _
    // Predicated region
    $region42: #{byol_forward.1} parent=1 // pred_check
      _
    $region43: #{byol_forward.1} parent=1 // pred_check_branch
      %46 = sbr.rel (0) target = $region45
    $region44: #{byol_forward.1} parent=1 // pred_region
      _
    $region45: #{byol_forward.1} parent=1 // pred_fallthru
      _
    // Predicated region
    $region46: #{byol_forward.1} parent=1 // pred_check
      _
    $region47: #{byol_forward.1} parent=1 // pred_check_branch
      %48 = sbr.rel (0) target = $region49
    $region48: #{byol_forward.1} parent=1 // pred_region
      _
    $region49: #{byol_forward.1} parent=1 // pred_fallthru
      _
    // Predicated region
    $region50: #{byol_forward.1} parent=1 // pred_check
      _
    $region51: #{byol_forward.1} parent=1 // pred_check_branch
      %50 = sbr.rel (0) target = $region53
    $region52: #{byol_forward.1} parent=1 // pred_region
      _
    $region53: #{byol_forward.1} parent=1 // pred_fallthru
      _
    %v52 = vld [vmem:[%s3] sm:$0xff]
    %v53 = vld [vmem:[%s3 + $0x8] sm:$0xff]
    %v54 = vld [vmem:[%s3 + $0x10] sm:$0xff]
    %v55 = vld [vmem:[%s3 + $0x18] sm:$0xff]
    %v56 = vld [vmem:[%s3 + $0x20] sm:$0xff]
    %v57 = vld [vmem:[%s3 + $0x28] sm:$0xff]
    %v58 = vld [vmem:[%s3 + $0x30] sm:$0xff]
    %v59 = vld [vmem:[%s3 + $0x38] sm:$0xff]
    %v60 = vld [vmem:[%s3 + $0x40] sm:$0xff]
    %v61 = vld [vmem:[%s3 + $0x48] sm:$0xff]
    %v62 = vld [vmem:[%s3 + $0x50] sm:$0xff]
    %v63 = vld [vmem:[%s3 + $0x58] sm:$0xff]
    %v64 = vld [vmem:[%s3 + $0x60] sm:$0xff]
    %v65 = vld [vmem:[%s3 + $0x68] sm:$0xff]
    %v66 = vld [vmem:[%s3 + $0x70] sm:$0xff]
    %v67 = vld [vmem:[%s3 + $0x78] sm:$0xff]
    %v68 = vld [vmem:[%s4] sm:$0xff]
    %v69 = vld [vmem:[%s4 + $0x8] sm:$0xff]
    %v70 = vld [vmem:[%s4 + $0x10] sm:$0xff]
    %v71 = vld [vmem:[%s4 + $0x18] sm:$0xff]
    %v72 = vld [vmem:[%s4 + $0x20] sm:$0xff]
    %v73 = vld [vmem:[%s4 + $0x28] sm:$0xff]
    %v74 = vld [vmem:[%s4 + $0x30] sm:$0xff]
    %v75 = vld [vmem:[%s4 + $0x38] sm:$0xff]
    %v76 = vld [vmem:[%s4 + $0x40] sm:$0xff]
    %v77 = vld [vmem:[%s4 + $0x48] sm:$0xff]
    %v78 = vld [vmem:[%s4 + $0x50] sm:$0xff]
    %v79 = vld [vmem:[%s4 + $0x58] sm:$0xff]
    %v80 = vld [vmem:[%s4 + $0x60] sm:$0xff]
    %v81 = vld [vmem:[%s4 + $0x68] sm:$0xff]
    %v82 = vld [vmem:[%s4 + $0x70] sm:$0xff]
    %v83 = vld [vmem:[%s4 + $0x78] sm:$0xff]
    %v84 = vld [vmem:[%s5] sm:$0x1]
    %v85 = vld [vmem:[%s6] sm:$0xff]
    %v86 = vld [vmem:[%s6 + $0x8] sm:$0xff]
    %v87 = vld [vmem:[%s6 + $0x10] sm:$0xff]
    %v88 = vld [vmem:[%s6 + $0x18] sm:$0xff]
    %v89 = vld [vmem:[%s6 + $0x20] sm:$0xff]
    %v90 = vld [vmem:[%s6 + $0x28] sm:$0xff]
    %v91 = vld [vmem:[%s6 + $0x30] sm:$0xff]
    %v92 = vld [vmem:[%s6 + $0x38] sm:$0xff]
    %v93 = vld [vmem:[%s6 + $0x40] sm:$0xff]
    %v94 = vld [vmem:[%s6 + $0x48] sm:$0xff]
    %v95 = vld [vmem:[%s6 + $0x50] sm:$0xff]
    %v96 = vld [vmem:[%s6 + $0x58] sm:$0xff]
    %v97 = vld [vmem:[%s6 + $0x60] sm:$0xff]
    %v98 = vld [vmem:[%s6 + $0x68] sm:$0xff]
    %v99 = vld [vmem:[%s6 + $0x70] sm:$0xff]
    %v100 = vld [vmem:[%s6 + $0x78] sm:$0xff]
    %v101 = vld [vmem:[%s7] sm:$0x1]
    %v102 = vld [vmem:[%s8] sm:$0xff]
    %v103 = vld [vmem:[%s8 + $0x8] sm:$0xff]
    %v104 = vld [vmem:[%s8 + $0x10] sm:$0xff]
    %v105 = vld [vmem:[%s8 + $0x18] sm:$0xff]
    %v106 = vld [vmem:[%s8 + $0x20] sm:$0xff]
    %v107 = vld [vmem:[%s8 + $0x28] sm:$0xff]
    %v108 = vld [vmem:[%s8 + $0x30] sm:$0xff]
    %v109 = vld [vmem:[%s8 + $0x38] sm:$0xff]
    %v110 = vld [vmem:[%s8 + $0x40] sm:$0xff]
    %v111 = vld [vmem:[%s8 + $0x48] sm:$0xff]
    %v112 = vld [vmem:[%s8 + $0x50] sm:$0xff]
    %v113 = vld [vmem:[%s8 + $0x58] sm:$0xff]
    %v114 = vld [vmem:[%s8 + $0x60] sm:$0xff]
    %v115 = vld [vmem:[%s8 + $0x68] sm:$0xff]
    %v116 = vld [vmem:[%s8 + $0x70] sm:$0xff]
    %v117 = vld [vmem:[%s8 + $0x78] sm:$0xff]
    %v118 = vmul.f32 %v102, 0.99
    %v119 = vmul.f32 %v103, 0.99
    %v120 = vmul.f32 %v104, 0.99
    %v121 = vmul.f32 %v105, 0.99
    %v122 = vmul.f32 %v106, 0.99
    %v123 = vmul.f32 %v107, 0.99
    %v124 = vmul.f32 %v108, 0.99
    %v125 = vmul.f32 %v109, 0.99
    %v126 = vmul.f32 %v110, 0.99
    %v127 = vmul.f32 %v111, 0.99
    %v128 = vmul.f32 %v112, 0.99
    %v129 = vmul.f32 %v113, 0.99
    %v130 = vmul.f32 %v114, 0.99
    %v131 = vmul.f32 %v115, 0.99
    %v132 = vmul.f32 %v116, 0.99
    %v133 = vmul.f32 %v117, 0.99
    %v134 = vmul.f32 %v52, 0.01
    %v135 = vmul.f32 %v53, 0.01
    %v136 = vmul.f32 %v54, 0.01
    %v137 = vmul.f32 %v55, 0.01
    %v138 = vmul.f32 %v56, 0.01
    %v139 = vmul.f32 %v57, 0.01
    %v140 = vmul.f32 %v58, 0.01
    %v141 = vmul.f32 %v59, 0.01
    %v142 = vmul.f32 %v60, 0.01
    %v143 = vmul.f32 %v61, 0.01
    %v144 = vmul.f32 %v62, 0.01
    %v145 = vmul.f32 %v63, 0.01
    %v146 = vmul.f32 %v64, 0.01
    %v147 = vmul.f32 %v65, 0.01
    %v148 = vmul.f32 %v66, 0.01
    %v149 = vmul.f32 %v67, 0.01
    %v150 = vadd.f32 %v118, %v134
    %v151 = vadd.f32 %v119, %v135
    %v152 = vadd.f32 %v120, %v136
    %v153 = vadd.f32 %v121, %v137
    %v154 = vadd.f32 %v122, %v138
    %v155 = vadd.f32 %v123, %v139
    %v156 = vadd.f32 %v124, %v140
    %v157 = vadd.f32 %v125, %v141
    %v158 = vadd.f32 %v126, %v142
    %v159 = vadd.f32 %v127, %v143
    %v160 = vadd.f32 %v128, %v144
    %v161 = vadd.f32 %v129, %v145
    %v162 = vadd.f32 %v130, %v146
    %v163 = vadd.f32 %v131, %v147
    %v164 = vadd.f32 %v132, %v148
    %v165 = vadd.f32 %v133, %v149
    %v166 = vld [vmem:[%s9] sm:$0xff]
    %v167 = vld [vmem:[%s9 + $0x8] sm:$0xff]
    %v168 = vld [vmem:[%s9 + $0x10] sm:$0xff]
    %v169 = vld [vmem:[%s9 + $0x18] sm:$0xff]
    %v170 = vld [vmem:[%s9 + $0x20] sm:$0xff]
    %v171 = vld [vmem:[%s9 + $0x28] sm:$0xff]
    %v172 = vld [vmem:[%s9 + $0x30] sm:$0xff]
    %v173 = vld [vmem:[%s9 + $0x38] sm:$0xff]
    %v174 = vld [vmem:[%s9 + $0x40] sm:$0xff]
    %v175 = vld [vmem:[%s9 + $0x48] sm:$0xff]
    %v176 = vld [vmem:[%s9 + $0x50] sm:$0xff]
    %v177 = vld [vmem:[%s9 + $0x58] sm:$0xff]
    %v178 = vld [vmem:[%s9 + $0x60] sm:$0xff]
    %v179 = vld [vmem:[%s9 + $0x68] sm:$0xff]
    %v180 = vld [vmem:[%s9 + $0x70] sm:$0xff]
    %v181 = vld [vmem:[%s9 + $0x78] sm:$0xff]
    %v182 = vmul.f32 %v166, 0.99
    %v183 = vmul.f32 %v167, 0.99
    %v184 = vmul.f32 %v168, 0.99
    %v185 = vmul.f32 %v169, 0.99
    %v186 = vmul.f32 %v170, 0.99
    %v187 = vmul.f32 %v171, 0.99
    %v188 = vmul.f32 %v172, 0.99
    %v189 = vmul.f32 %v173, 0.99
    %v190 = vmul.f32 %v174, 0.99
    %v191 = vmul.f32 %v175, 0.99
    %v192 = vmul.f32 %v176, 0.99
    %v193 = vmul.f32 %v177, 0.99
    %v194 = vmul.f32 %v178, 0.99
    %v195 = vmul.f32 %v179, 0.99
    %v196 = vmul.f32 %v180, 0.99
    %v197 = vmul.f32 %v181, 0.99
    %v198 = vmul.f32 %v68, 0.01
    %v199 = vmul.f32 %v69, 0.01
    %v200 = vmul.f32 %v70, 0.01
    %v201 = vmul.f32 %v71, 0.01
    %v202 = vmul.f32 %v72, 0.01
    %v203 = vmul.f32 %v73, 0.01
    %v204 = vmul.f32 %v74, 0.01
    %v205 = vmul.f32 %v75, 0.01
    %v206 = vmul.f32 %v76, 0.01
    %v207 = vmul.f32 %v77, 0.01
    %v208 = vmul.f32 %v78, 0.01
    %v209 = vmul.f32 %v79, 0.01
    %v210 = vmul.f32 %v80, 0.01
    %v211 = vmul.f32 %v81, 0.01
    %v212 = vmul.f32 %v82, 0.01
    %v213 = vmul.f32 %v83, 0.01
    %v214 = vadd.f32 %v182, %v198
    %v215 = vadd.f32 %v183, %v199
    %v216 = vadd.f32 %v184, %v200
    %v217 = vadd.f32 %v185, %v201
    %v218 = vadd.f32 %v186, %v202
    %v219 = vadd.f32 %v187, %v203
    %v220 = vadd.f32 %v188, %v204
    %v221 = vadd.f32 %v189, %v205
    %v222 = vadd.f32 %v190, %v206
    %v223 = vadd.f32 %v191, %v207
    %v224 = vadd.f32 %v192, %v208
    %v225 = vadd.f32 %v193, %v209
    %v226 = vadd.f32 %v194, %v210
    %v227 = vadd.f32 %v195, %v211
    %v228 = vadd.f32 %v196, %v212
    %v229 = vadd.f32 %v197, %v213
    %v230 = vld [vmem:[%s10] sm:$0x1]
    %v231 = vmul.f32 %v230, 0.99
    %v232 = vmul.f32 %v84, 0.01
    %v233 = vadd.f32 %v231, %v232
    %v234 = vld [vmem:[%s11] sm:$0xff]
    %v235 = vld [vmem:[%s11 + $0x8] sm:$0xff]
    %v236 = vld [vmem:[%s11 + $0x10] sm:$0xff]
    %v237 = vld [vmem:[%s11 + $0x18] sm:$0xff]
    %v238 = vld [vmem:[%s11 + $0x20] sm:$0xff]
    %v239 = vld [vmem:[%s11 + $0x28] sm:$0xff]
    %v240 = vld [vmem:[%s11 + $0x30] sm:$0xff]
    %v241 = vld [vmem:[%s11 + $0x38] sm:$0xff]
    %v242 = vld [vmem:[%s11 + $0x40] sm:$0xff]
    %v243 = vld [vmem:[%s11 + $0x48] sm:$0xff]
    %v244 = vld [vmem:[%s11 + $0x50] sm:$0xff]
    %v245 = vld [vmem:[%s11 + $0x58] sm:$0xff]
    %v246 = vld [vmem:[%s11 + $0x60] sm:$0xff]
    %v247 = vld [vmem:[%s11 + $0x68] sm:$0xff]
    %v248 = vld [vmem:[%s11 + $0x70] sm:$0xff]
    %v249 = vld [vmem:[%s11 + $0x78] sm:$0xff]
    %v250 = vmul.f32 %v234, 0.99
    %v251 = vmul.f32 %v235, 0.99
    %v252 = vmul.f32 %v236, 0.99
    %v253 = vmul.f32 %v237, 0.99
    %v254 = vmul.f32 %v238, 0.99
    %v255 = vmul.f32 %v239, 0.99
    %v256 = vmul.f32 %v240, 0.99
    %v257 = vmul.f32 %v241, 0.99
    %v258 = vmul.f32 %v242, 0.99
    %v259 = vmul.f32 %v243, 0.99
    %v260 = vmul.f32 %v244, 0.99
    %v261 = vmul.f32 %v245, 0.99
    %v262 = vmul.f32 %v246, 0.99
    %v263 = vmul.f32 %v247, 0.99
    %v264 = vmul.f32 %v248, 0.99
    %v265 = vmul.f32 %v249, 0.99
    %v266 = vmul.f32 %v85, 0.01
    %v267 = vmul.f32 %v86, 0.01
    %v268 = vmul.f32 %v87, 0.01
    %v269 = vmul.f32 %v88, 0.01
    %v270 = vmul.f32 %v89, 0.01
    %v271 = vmul.f32 %v90, 0.01
    %v272 = vmul.f32 %v91, 0.01
    %v273 = vmul.f32 %v92, 0.01
    %v274 = vmul.f32 %v93, 0.01
    %v275 = vmul.f32 %v94, 0.01
    %v276 = vmul.f32 %v95, 0.01
    %v277 = vmul.f32 %v96, 0.01
    %v278 = vmul.f32 %v97, 0.01
    %v279 = vmul.f32 %v98, 0.01
    %v280 = vmul.f32 %v99, 0.01
    %v281 = vmul.f32 %v100, 0.01
    %v282 = vadd.f32 %v250, %v266
    %v283 = vadd.f32 %v251, %v267
    %v284 = vadd.f32 %v252, %v268
    %v285 = vadd.f32 %v253, %v269
    %v286 = vadd.f32 %v254, %v270
    %v287 = vadd.f32 %v255, %v271
    %v288 = vadd.f32 %v256, %v272
    %v289 = vadd.f32 %v257, %v273
    %v290 = vadd.f32 %v258, %v274
    %v291 = vadd.f32 %v259, %v275
    %v292 = vadd.f32 %v260, %v276
    %v293 = vadd.f32 %v261, %v277
    %v294 = vadd.f32 %v262, %v278
    %v295 = vadd.f32 %v263, %v279
    %v296 = vadd.f32 %v264, %v280
    %v297 = vadd.f32 %v265, %v281
    %v298 = vld [vmem:[%s12] sm:$0x1]
    %v299 = vmul.f32 %v298, 0.99
    %v300 = vmul.f32 %v101, 0.01
    %v301 = vadd.f32 %v299, %v300
    %302 = vst [vmem:[%s14] sm:$0xff] %v150
    %303 = vst [vmem:[%s14 + $0x8] sm:$0xff] %v151
    %304 = vst [vmem:[%s14 + $0x10] sm:$0xff] %v152
    %305 = vst [vmem:[%s14 + $0x18] sm:$0xff] %v153
    %306 = vst [vmem:[%s14 + $0x20] sm:$0xff] %v154
    %307 = vst [vmem:[%s14 + $0x28] sm:$0xff] %v155
    %308 = vst [vmem:[%s14 + $0x30] sm:$0xff] %v156
    %309 = vst [vmem:[%s14 + $0x38] sm:$0xff] %v157
    %310 = vst [vmem:[%s14 + $0x40] sm:$0xff] %v158
    %311 = vst [vmem:[%s14 + $0x48] sm:$0xff] %v159
    %312 = vst [vmem:[%s14 + $0x50] sm:$0xff] %v160
    %313 = vst [vmem:[%s14 + $0x58] sm:$0xff] %v161
    %314 = vst [vmem:[%s14 + $0x60] sm:$0xff] %v162
    %315 = vst [vmem:[%s14 + $0x68] sm:$0xff] %v163
    %316 = vst [vmem:[%s14 + $0x70] sm:$0xff] %v164
    %317 = vst [vmem:[%s14 + $0x78] sm:$0xff] %v165
    %318 = vst [vmem:[%s15] sm:$0xff] %v214
    %319 = vst [vmem:[%s15 + $0x8] sm:$0xff] %v215
    %320 = vst [vmem:[%s15 + $0x10] sm:$0xff] %v216
    %321 = vst [vmem:[%s15 + $0x18] sm:$0xff] %v217
    %322 = vst [vmem:[%s15 + $0x20] sm:$0xff] %v218
    %323 = vst [vmem:[%s15 + $0x28] sm:$0xff] %v219
    %324 = vst [vmem:[%s15 + $0x30] sm:$0xff] %v220
    %325 = vst [vmem:[%s15 + $0x38] sm:$0xff] %v221
    %326 = vst [vmem:[%s15 + $0x40] sm:$0xff] %v222
    %327 = vst [vmem:[%s15 + $0x48] sm:$0xff] %v223
    %328 = vst [vmem:[%s15 + $0x50] sm:$0xff] %v224
    %329 = vst [vmem:[%s15 + $0x58] sm:$0xff] %v225
    %330 = vst [vmem:[%s15 + $0x60] sm:$0xff] %v226
    %331 = vst [vmem:[%s15 + $0x68] sm:$0xff] %v227
    %332 = vst [vmem:[%s15 + $0x70] sm:$0xff] %v228
    %333 = vst [vmem:[%s15 + $0x78] sm:$0xff] %v229
    %334 = vst [vmem:[%s16] sm:$0x1] %v233
    %335 = vst [vmem:[%s17] sm:$0xff] %v282
    %336 = vst [vmem:[%s17 + $0x8] sm:$0xff] %v283
    %337 = vst [vmem:[%s17 + $0x10] sm:$0xff] %v284
    %338 = vst [vmem:[%s17 + $0x18] sm:$0xff] %v285
    %339 = vst [vmem:[%s17 + $0x20] sm:$0xff] %v286
    %340 = vst [vmem:[%s17 + $0x28] sm:$0xff] %v287
    %341 = vst [vmem:[%s17 + $0x30] sm:$0xff] %v288
    %342 = vst [vmem:[%s17 + $0x38] sm:$0xff] %v289
    %343 = vst [vmem:[%s17 + $0x40] sm:$0xff] %v290
    %344 = vst [vmem:[%s17 + $0x48] sm:$0xff] %v291
    %345 = vst [vmem:[%s17 + $0x50] sm:$0xff] %v292
    %346 = vst [vmem:[%s17 + $0x58] sm:$0xff] %v293
    %347 = vst [vmem:[%s17 + $0x60] sm:$0xff] %v294
    %348 = vst [vmem:[%s17 + $0x68] sm:$0xff] %v295
    %349 = vst [vmem:[%s17 + $0x70] sm:$0xff] %v296
    %350 = vst [vmem:[%s17 + $0x78] sm:$0xff] %v297
    %351 = vst [vmem:[%s18] sm:$0x1] %v301
    %v352 = vld [vmem:[%s2] sm:$0xff]
    %v353 = vld [vmem:[%s0] sm:$0xf]
    %v354 = vld [vmem:[%s0 + $0x4] sm:$0xf]
    %v355 = vld [vmem:[%s0 + $0x8] sm:$0xf]
    %v356 = vld [vmem:[%s0 + $0xc] sm:$0xf]
    %v357 = vld [vmem:[%s0 + $0x10] sm:$0xf]
    %v358 = vld [vmem:[%s0 + $0x14] sm:$0xf]
    %v359 = vld [vmem:[%s0 + $0x18] sm:$0xf]
    %v360 = vld [vmem:[%s0 + $0x1c] sm:$0xf]
    %v361 = vld [vmem:[%s0 + $0x20] sm:$0xf]
    %v362 = vld [vmem:[%s0 + $0x24] sm:$0xf]
    %v363 = vld [vmem:[%s0 + $0x28] sm:$0xf]
    %v364 = vld [vmem:[%s0 + $0x2c] sm:$0xf]
    %v365 = vld [vmem:[%s0 + $0x30] sm:$0xf]
    %v366 = vld [vmem:[%s0 + $0x34] sm:$0xf]
    %v367 = vld [vmem:[%s0 + $0x38] sm:$0xf]
    %v368 = vld [vmem:[%s0 + $0x3c] sm:$0xf]
    %v369 = vld [vmem:[%s0 + $0x40] sm:$0xf]
    %v370 = vld [vmem:[%s0 + $0x44] sm:$0xf]
    %v371 = vld [vmem:[%s0 + $0x48] sm:$0xf]
    %v372 = vld [vmem:[%s0 + $0x4c] sm:$0xf]
    %v373 = vld [vmem:[%s0 + $0x50] sm:$0xf]
    %v374 = vld [vmem:[%s0 + $0x54] sm:$0xf]
    %v375 = vld [vmem:[%s0 + $0x58] sm:$0xf]
    %v376 = vld [vmem:[%s0 + $0x5c] sm:$0xf]
    %v377 = vld [vmem:[%s0 + $0x60] sm:$0xf]
    %v378 = vld [vmem:[%s0 + $0x64] sm:$0xf]
    %v379 = vld [vmem:[%s0 + $0x68] sm:$0xf]
    %v380 = vld [vmem:[%s0 + $0x6c] sm:$0xf]
    %v381 = vld [vmem:[%s0 + $0x70] sm:$0xf]
    %v382 = vld [vmem:[%s0 + $0x74] sm:$0xf]
    %v383 = vld [vmem:[%s0 + $0x78] sm:$0xf]
    %v384 = vld [vmem:[%s0 + $0x7c] sm:$0xf]
    %v385 = vld [vmem:[%s0 + $0x80] sm:$0xf]
    %v386 = vld [vmem:[%s0 + $0x84] sm:$0xf]
    %v387 = vld [vmem:[%s0 + $0x88] sm:$0xf]
    %v388 = vld [vmem:[%s0 + $0x8c] sm:$0xf]
    %v389 = vld [vmem:[%s0 + $0x90] sm:$0xf]
    %v390 = vld [vmem:[%s0 + $0x94] sm:$0xf]
    %v391 = vld [vmem:[%s0 + $0x98] sm:$0xf]
    %v392 = vld [vmem:[%s0 + $0x9c] sm:$0xf]
    %v393 = vld [vmem:[%s0 + $0xa0] sm:$0xf]
    %v394 = vld [vmem:[%s0 + $0xa4] sm:$0xf]
    %v395 = vld [vmem:[%s0 + $0xa8] sm:$0xf]
    %v396 = vld [vmem:[%s0 + $0xac] sm:$0xf]
    %v397 = vld [vmem:[%s0 + $0xb0] sm:$0xf]
    %v398 = vld [vmem:[%s0 + $0xb4] sm:$0xf]
    %v399 = vld [vmem:[%s0 + $0xb8] sm:$0xf]
    %v400 = vld [vmem:[%s0 + $0xbc] sm:$0xf]
    %v401 = vld [vmem:[%s0 + $0xc0] sm:$0xf]
    %v402 = vld [vmem:[%s0 + $0xc4] sm:$0xf]
    %v403 = vld [vmem:[%s0 + $0xc8] sm:$0xf]
    %v404 = vld [vmem:[%s0 + $0xcc] sm:$0xf]
    %v405 = vld [vmem:[%s0 + $0xd0] sm:$0xf]
    %v406 = vld [vmem:[%s0 + $0xd4] sm:$0xf]
    %v407 = vld [vmem:[%s0 + $0xd8] sm:$0xf]
    %v408 = vld [vmem:[%s0 + $0xdc] sm:$0xf]
    %v409 = vld [vmem:[%s0 + $0xe0] sm:$0xf]
    %v410 = vld [vmem:[%s0 + $0xe4] sm:$0xf]
    %v411 = vld [vmem:[%s0 + $0xe8] sm:$0xf]
    %v412 = vld [vmem:[%s0 + $0xec] sm:$0xf]
    %v413 = vld [vmem:[%s0 + $0xf0] sm:$0xf]
    %v414 = vld [vmem:[%s0 + $0xf4] sm:$0xf]
    %v415 = vld [vmem:[%s0 + $0xf8] sm:$0xf]
    %v416 = vld [vmem:[%s0 + $0xfc] sm:$0xf]
    %v417 = vpack.c.bf16 %v53, %v52
    %v418 = vpack.c.bf16 %v55, %v54
    %v419 = vpack.c.bf16 %v57, %v56
    %v420 = vpack.c.bf16 %v59, %v58
    %v421 = vpack.c.bf16 %v61, %v60
    %v422 = vpack.c.bf16 %v63, %v62
    %v423 = vpack.c.bf16 %v65, %v64
    %v424 = vpack.c.bf16 %v67, %v66
    %v489 = vunpack.c.l.b16 %v353
    %v490 = vunpack.c.l.b16 %v354
    %v491 = vunpack.c.l.b16 %v355
    %v492 = vunpack.c.l.b16 %v356
    %v493 = vunpack.c.l.b16 %v357
    %v494 = vunpack.c.l.b16 %v358
    %v495 = vunpack.c.l.b16 %v359
    %v496 = vunpack.c.l.b16 %v360
    %v497 = vunpack.c.l.b16 %v361
    %v498 = vunpack.c.l.b16 %v362
    %v499 = vunpack.c.l.b16 %v363
    %v500 = vunpack.c.l.b16 %v364
    %v501 = vunpack.c.l.b16 %v365
    %v502 = vunpack.c.l.b16 %v366
    %v503 = vunpack.c.l.b16 %v367
    %v504 = vunpack.c.l.b16 %v368
    %v505 = vunpack.c.l.b16 %v369
    %v506 = vunpack.c.l.b16 %v370
    %v507 = vunpack.c.l.b16 %v371
    %v508 = vunpack.c.l.b16 %v372
    %v509 = vunpack.c.l.b16 %v373
    %v510 = vunpack.c.l.b16 %v374
    %v511 = vunpack.c.l.b16 %v375
    %v512 = vunpack.c.l.b16 %v376
    %v513 = vunpack.c.l.b16 %v377
    %v514 = vunpack.c.l.b16 %v378
    %v515 = vunpack.c.l.b16 %v379
    %v516 = vunpack.c.l.b16 %v380
    %v517 = vunpack.c.l.b16 %v381
    %v518 = vunpack.c.l.b16 %v382
    %v519 = vunpack.c.l.b16 %v383
    %v520 = vunpack.c.l.b16 %v384
    %v521 = vunpack.c.l.b16 %v385
    %v522 = vunpack.c.l.b16 %v386
    %v523 = vunpack.c.l.b16 %v387
    %v524 = vunpack.c.l.b16 %v388
    %v525 = vunpack.c.l.b16 %v389
    %v526 = vunpack.c.l.b16 %v390
    %v527 = vunpack.c.l.b16 %v391
    %v528 = vunpack.c.l.b16 %v392
    %v529 = vunpack.c.l.b16 %v393
    %v530 = vunpack.c.l.b16 %v394
    %v531 = vunpack.c.l.b16 %v395
    %v532 = vunpack.c.l.b16 %v396
    %v533 = vunpack.c.l.b16 %v397
    %v534 = vunpack.c.l.b16 %v398
    %v535 = vunpack.c.l.b16 %v399
    %v536 = vunpack.c.l.b16 %v400
    %v537 = vunpack.c.l.b16 %v401
    %v538 = vunpack.c.l.b16 %v402
    %v539 = vunpack.c.l.b16 %v403
    %v540 = vunpack.c.l.b16 %v404
    %v541 = vunpack.c.l.b16 %v405
    %v542 = vunpack.c.l.b16 %v406
    %v543 = vunpack.c.l.b16 %v407
    %v544 = vunpack.c.l.b16 %v408
    %v545 = vunpack.c.l.b16 %v409
    %v546 = vunpack.c.l.b16 %v410
    %v547 = vunpack.c.l.b16 %v411
    %v548 = vunpack.c.l.b16 %v412
    %v549 = vunpack.c.l.b16 %v413
    %v550 = vunpack.c.l.b16 %v414
    %v551 = vunpack.c.l.b16 %v415
    %v552 = vunpack.c.l.b16 %v416
    %v553 = vpack.c.b16 %v490, %v489
    %v554 = vpack.c.b16 %v492, %v491
    %v555 = vpack.c.b16 %v494, %v493
    %v556 = vpack.c.b16 %v496, %v495
    %v557 = vpack.c.b16 %v498, %v497
    %v558 = vpack.c.b16 %v500, %v499
    %v559 = vpack.c.b16 %v502, %v501
    %v560 = vpack.c.b16 %v504, %v503
    %v561 = vpack.c.b16 %v506, %v505
    %v562 = vpack.c.b16 %v508, %v507
    %v563 = vpack.c.b16 %v510, %v509
    %v564 = vpack.c.b16 %v512, %v511
    %v565 = vpack.c.b16 %v514, %v513
    %v566 = vpack.c.b16 %v516, %v515
    %v567 = vpack.c.b16 %v518, %v517
    %v568 = vpack.c.b16 %v520, %v519
    %v569 = vpack.c.b16 %v522, %v521
    %v570 = vpack.c.b16 %v524, %v523
    %v571 = vpack.c.b16 %v526, %v525
    %v572 = vpack.c.b16 %v528, %v527
    %v573 = vpack.c.b16 %v530, %v529
    %v574 = vpack.c.b16 %v532, %v531
    %v575 = vpack.c.b16 %v534, %v533
    %v576 = vpack.c.b16 %v536, %v535
    %v577 = vpack.c.b16 %v538, %v537
    %v578 = vpack.c.b16 %v540, %v539
    %v579 = vpack.c.b16 %v542, %v541
    %v580 = vpack.c.b16 %v544, %v543
    %v581 = vpack.c.b16 %v546, %v545
    %v582 = vpack.c.b16 %v548, %v547
    %v583 = vpack.c.b16 %v550, %v549
    %v584 = vpack.c.b16 %v552, %v551
    %617 = vmatprep.subr.bf16.mxu0 0
    %618 = vmatpush1.bf16.msra.mxu0 %v424
    %619 = vmatprep.subr.bf16.mxu0 0
    %620 = vmatpush1.bf16.msra.mxu0 %v423
    %621 = vmatprep.subr.bf16.mxu0 0
    %622 = vmatpush1.bf16.msra.mxu0 %v422
    %623 = vmatprep.subr.bf16.mxu0 0
    %624 = vmatpush1.bf16.msra.mxu0 %v421
    %625 = vmatprep.subr.bf16.mxu0 0
    %626 = vmatpush1.bf16.msra.mxu0 %v420
    %627 = vmatprep.subr.bf16.mxu0 0
    %628 = vmatpush1.bf16.msra.mxu0 %v419
    %629 = vmatprep.subr.bf16.mxu0 0
    %630 = vmatpush1.bf16.msra.mxu0 %v418
    %631 = vmatprep.subr.bf16.mxu0 0
    %632 = vmatpush1.bf16.msra.mxu0 %v417
    %633 = vmatprep.subr.bf16.mxu0 0
    %634 = vmatpush2.bf16.msra.mxu0 0
    %635 = vmatprep.subr.bf16.mxu0 0
    %636 = vmatpush2.bf16.msra.mxu0 0
    %637 = vmatprep.subr.bf16.mxu0 0
    %638 = vmatpush2.bf16.msra.mxu0 0
    %639 = vmatprep.subr.bf16.mxu0 0
    %640 = vmatpush2.bf16.msra.mxu0 0
    %641 = vmatprep.subr.bf16.mxu0 0
    %642 = vmatpush2.bf16.msra.mxu0 0
    %643 = vmatprep.subr.bf16.mxu0 0
    %644 = vmatpush2.bf16.msra.mxu0 0
    %645 = vmatprep.subr.bf16.mxu0 0
    %646 = vmatpush2.bf16.msra.mxu0 0
    %647 = vmatprep.subr.bf16.mxu0 0
    %648 = vmatpush2.bf16.msra.mxu0 0
    %649 = vmatprep.mubr.bf16.mxu0 0
    %650 = vmatmul.mubr.bf16.gmra.mxu0 %v553
    %v651 = vpop.f32.mrf.mxu0
    %v652 = vadd.f32 0.0, %v651
    %v653 = vpop.f32.mrf.mxu0
    %v654 = vpop.f32.mrf.mxu0
    %v655 = vadd.f32 0.0, %v654
    %v656 = vpop.f32.mrf.mxu0
    %657 = vmatprep.mubr.bf16.mxu0 0
    %658 = vmatmul.mubr.bf16.gmra.mxu0 %v554
    %v659 = vpop.f32.mrf.mxu0
    %v660 = vadd.f32 0.0, %v659
    %v661 = vpop.f32.mrf.mxu0
    %v662 = vpop.f32.mrf.mxu0
    %v663 = vadd.f32 0.0, %v662
    %v664 = vpop.f32.mrf.mxu0
    %665 = vmatprep.mubr.bf16.mxu0 0
    %666 = vmatmul.mubr.bf16.gmra.mxu0 %v555
    %v667 = vpop.f32.mrf.mxu0
    %v668 = vadd.f32 0.0, %v667
    %v669 = vpop.f32.mrf.mxu0
    %v670 = vpop.f32.mrf.mxu0
    %v671 = vadd.f32 0.0, %v670
    %v672 = vpop.f32.mrf.mxu0
    %673 = vmatprep.mubr.bf16.mxu0 0
    %674 = vmatmul.mubr.bf16.gmra.mxu0 %v556
    %v675 = vpop.f32.mrf.mxu0
    %v676 = vadd.f32 0.0, %v675
    %v677 = vpop.f32.mrf.mxu0
    %v678 = vpop.f32.mrf.mxu0
    %v679 = vadd.f32 0.0, %v678
    %v680 = vpop.f32.mrf.mxu0
    %681 = vmatprep.mubr.bf16.mxu0 0
    %682 = vmatmul.mubr.bf16.gmra.mxu0 %v557
    %v683 = vpop.f32.mrf.mxu0
    %v684 = vadd.f32 0.0, %v683
    %v685 = vpop.f32.mrf.mxu0
    %v686 = vpop.f32.mrf.mxu0
    %v687 = vadd.f32 0.0, %v686
    %v688 = vpop.f32.mrf.mxu0
    %689 = vmatprep.mubr.bf16.mxu0 0
    %690 = vmatmul.mubr.bf16.gmra.mxu0 %v558
    %v691 = vpop.f32.mrf.mxu0
    %v692 = vadd.f32 0.0, %v691
    %v693 = vpop.f32.mrf.mxu0
    %v694 = vpop.f32.mrf.mxu0
    %v695 = vadd.f32 0.0, %v694
    %v696 = vpop.f32.mrf.mxu0
    %697 = vmatprep.mubr.bf16.mxu0 0
    %698 = vmatmul.mubr.bf16.gmra.mxu0 %v559
    %v699 = vpop.f32.mrf.mxu0
    %v700 = vadd.f32 0.0, %v699
    %v701 = vpop.f32.mrf.mxu0
    %v702 = vpop.f32.mrf.mxu0
    %v703 = vadd.f32 0.0, %v702
    %v704 = vpop.f32.mrf.mxu0
    %705 = vmatprep.mubr.bf16.mxu0 0
    %706 = vmatmul.mubr.bf16.gmra.mxu0 %v560
    %v707 = vpop.f32.mrf.mxu0
    %v708 = vadd.f32 0.0, %v707
    %v709 = vpop.f32.mrf.mxu0
    %v710 = vpop.f32.mrf.mxu0
    %v711 = vadd.f32 0.0, %v710
    %v712 = vpop.f32.mrf.mxu0
    %713 = vmatprep.mubr.bf16.mxu0 0
    %714 = vmatmul.mubr.bf16.gmra.mxu0 %v561
    %v715 = vpop.f32.mrf.mxu0
    %v716 = vadd.f32 0.0, %v715
    %v717 = vpop.f32.mrf.mxu0
    %v718 = vpop.f32.mrf.mxu0
    %v719 = vadd.f32 0.0, %v718
    %v720 = vpop.f32.mrf.mxu0
    %721 = vmatprep.mubr.bf16.mxu0 0
    %722 = vmatmul.mubr.bf16.gmra.mxu0 %v562
    %v723 = vpop.f32.mrf.mxu0
    %v724 = vadd.f32 0.0, %v723
    %v725 = vpop.f32.mrf.mxu0
    %v726 = vpop.f32.mrf.mxu0
    %v727 = vadd.f32 0.0, %v726
    %v728 = vpop.f32.mrf.mxu0
    %729 = vmatprep.mubr.bf16.mxu0 0
    %730 = vmatmul.mubr.bf16.gmra.mxu0 %v563
    %v731 = vpop.f32.mrf.mxu0
    %v732 = vadd.f32 0.0, %v731
    %v733 = vpop.f32.mrf.mxu0
    %v734 = vpop.f32.mrf.mxu0
    %v735 = vadd.f32 0.0, %v734
    %v736 = vpop.f32.mrf.mxu0
    %737 = vmatprep.mubr.bf16.mxu0 0
    %738 = vmatmul.mubr.bf16.gmra.mxu0 %v564
    %v739 = vpop.f32.mrf.mxu0
    %v740 = vadd.f32 0.0, %v739
    %v741 = vpop.f32.mrf.mxu0
    %v742 = vpop.f32.mrf.mxu0
    %v743 = vadd.f32 0.0, %v742
    %v744 = vpop.f32.mrf.mxu0
    %745 = vmatprep.mubr.bf16.mxu0 0
    %746 = vmatmul.mubr.bf16.gmra.mxu0 %v565
    %v747 = vpop.f32.mrf.mxu0
    %v748 = vadd.f32 0.0, %v747
    %v749 = vpop.f32.mrf.mxu0
    %v750 = vpop.f32.mrf.mxu0
    %v751 = vadd.f32 0.0, %v750
    %v752 = vpop.f32.mrf.mxu0
    %753 = vmatprep.mubr.bf16.mxu0 0
    %754 = vmatmul.mubr.bf16.gmra.mxu0 %v566
    %v755 = vpop.f32.mrf.mxu0
    %v756 = vadd.f32 0.0, %v755
    %v757 = vpop.f32.mrf.mxu0
    %v758 = vpop.f32.mrf.mxu0
    %v759 = vadd.f32 0.0, %v758
    %v760 = vpop.f32.mrf.mxu0
    %761 = vmatprep.mubr.bf16.mxu0 0
    %762 = vmatmul.mubr.bf16.gmra.mxu0 %v567
    %v763 = vpop.f32.mrf.mxu0
    %v764 = vadd.f32 0.0, %v763
    %v765 = vpop.f32.mrf.mxu0
    %v766 = vpop.f32.mrf.mxu0
    %v767 = vadd.f32 0.0, %v766
    %v768 = vpop.f32.mrf.mxu0
    %769 = vmatprep.mubr.bf16.mxu0 0
    %770 = vmatmul.mubr.bf16.gmra.mxu0 %v568
    %v771 = vpop.f32.mrf.mxu0
    %v772 = vadd.f32 0.0, %v771
    %v773 = vpop.f32.mrf.mxu0
    %v774 = vpop.f32.mrf.mxu0
    %v775 = vadd.f32 0.0, %v774
    %v776 = vpop.f32.mrf.mxu0
    %777 = vmatprep.mubr.bf16.mxu0 0
    %778 = vmatmul.mubr.bf16.gmra.mxu0 %v569
    %v779 = vpop.f32.mrf.mxu0
    %v780 = vadd.f32 0.0, %v779
    %v781 = vpop.f32.mrf.mxu0
    %v782 = vpop.f32.mrf.mxu0
    %v783 = vadd.f32 0.0, %v782
    %v784 = vpop.f32.mrf.mxu0
    %785 = vmatprep.mubr.bf16.mxu0 0
    %786 = vmatmul.mubr.bf16.gmra.mxu0 %v570
    %v787 = vpop.f32.mrf.mxu0
    %v788 = vadd.f32 0.0, %v787
    %v789 = vpop.f32.mrf.mxu0
    %v790 = vpop.f32.mrf.mxu0
    %v791 = vadd.f32 0.0, %v790
    %v792 = vpop.f32.mrf.mxu0
    %793 = vmatprep.mubr.bf16.mxu0 0
    %794 = vmatmul.mubr.bf16.gmra.mxu0 %v571
    %v795 = vpop.f32.mrf.mxu0
    %v796 = vadd.f32 0.0, %v795
    %v797 = vpop.f32.mrf.mxu0
    %v798 = vpop.f32.mrf.mxu0
    %v799 = vadd.f32 0.0, %v798
    %v800 = vpop.f32.mrf.mxu0
    %801 = vmatprep.mubr.bf16.mxu0 0
    %802 = vmatmul.mubr.bf16.gmra.mxu0 %v572
    %v803 = vpop.f32.mrf.mxu0
    %v804 = vadd.f32 0.0, %v803
    %v805 = vpop.f32.mrf.mxu0
    %v806 = vpop.f32.mrf.mxu0
    %v807 = vadd.f32 0.0, %v806
    %v808 = vpop.f32.mrf.mxu0
    %809 = vmatprep.mubr.bf16.mxu0 0
    %810 = vmatmul.mubr.bf16.gmra.mxu0 %v573
    %v811 = vpop.f32.mrf.mxu0
    %v812 = vadd.f32 0.0, %v811
    %v813 = vpop.f32.mrf.mxu0
    %v814 = vpop.f32.mrf.mxu0
    %v815 = vadd.f32 0.0, %v814
    %v816 = vpop.f32.mrf.mxu0
    %817 = vmatprep.mubr.bf16.mxu0 0
    %818 = vmatmul.mubr.bf16.gmra.mxu0 %v574
    %v819 = vpop.f32.mrf.mxu0
    %v820 = vadd.f32 0.0, %v819
    %v821 = vpop.f32.mrf.mxu0
    %v822 = vpop.f32.mrf.mxu0
    %v823 = vadd.f32 0.0, %v822
    %v824 = vpop.f32.mrf.mxu0
    %825 = vmatprep.mubr.bf16.mxu0 0
    %826 = vmatmul.mubr.bf16.gmra.mxu0 %v575
    %v827 = vpop.f32.mrf.mxu0
    %v828 = vadd.f32 0.0, %v827
    %v829 = vpop.f32.mrf.mxu0
    %v830 = vpop.f32.mrf.mxu0
    %v831 = vadd.f32 0.0, %v830
    %v832 = vpop.f32.mrf.mxu0
    %833 = vmatprep.mubr.bf16.mxu0 0
    %834 = vmatmul.mubr.bf16.gmra.mxu0 %v576
    %v835 = vpop.f32.mrf.mxu0
    %v836 = vadd.f32 0.0, %v835
    %v837 = vpop.f32.mrf.mxu0
    %v838 = vpop.f32.mrf.mxu0
    %v839 = vadd.f32 0.0, %v838
    %v840 = vpop.f32.mrf.mxu0
    %841 = vmatprep.mubr.bf16.mxu0 0
    %842 = vmatmul.mubr.bf16.gmra.mxu0 %v577
    %v843 = vpop.f32.mrf.mxu0
    %v844 = vadd.f32 0.0, %v843
    %v845 = vpop.f32.mrf.mxu0
    %v846 = vpop.f32.mrf.mxu0
    %v847 = vadd.f32 0.0, %v846
    %v848 = vpop.f32.mrf.mxu0
    %849 = vmatprep.mubr.bf16.mxu0 0
    %850 = vmatmul.mubr.bf16.gmra.mxu0 %v578
    %v851 = vpop.f32.mrf.mxu0
    %v852 = vadd.f32 0.0, %v851
    %v853 = vpop.f32.mrf.mxu0
    %v854 = vpop.f32.mrf.mxu0
    %v855 = vadd.f32 0.0, %v854
    %v856 = vpop.f32.mrf.mxu0
    %857 = vmatprep.mubr.bf16.mxu0 0
    %858 = vmatmul.mubr.bf16.gmra.mxu0 %v579
    %v859 = vpop.f32.mrf.mxu0
    %v860 = vadd.f32 0.0, %v859
    %v861 = vpop.f32.mrf.mxu0
    %v862 = vpop.f32.mrf.mxu0
    %v863 = vadd.f32 0.0, %v862
    %v864 = vpop.f32.mrf.mxu0
    %865 = vmatprep.mubr.bf16.mxu0 0
    %866 = vmatmul.mubr.bf16.gmra.mxu0 %v580
    %v867 = vpop.f32.mrf.mxu0
    %v868 = vadd.f32 0.0, %v867
    %v869 = vpop.f32.mrf.mxu0
    %v870 = vpop.f32.mrf.mxu0
    %v871 = vadd.f32 0.0, %v870
    %v872 = vpop.f32.mrf.mxu0
    %873 = vmatprep.mubr.bf16.mxu0 0
    %874 = vmatmul.mubr.bf16.gmra.mxu0 %v581
    %v875 = vpop.f32.mrf.mxu0
    %v876 = vadd.f32 0.0, %v875
    %v877 = vpop.f32.mrf.mxu0
    %v878 = vpop.f32.mrf.mxu0
    %v879 = vadd.f32 0.0, %v878
    %v880 = vpop.f32.mrf.mxu0
    %881 = vmatprep.mubr.bf16.mxu0 0
    %882 = vmatmul.mubr.bf16.gmra.mxu0 %v582
    %v883 = vpop.f32.mrf.mxu0
    %v884 = vadd.f32 0.0, %v883
    %v885 = vpop.f32.mrf.mxu0
    %v886 = vpop.f32.mrf.mxu0
    %v887 = vadd.f32 0.0, %v886
    %v888 = vpop.f32.mrf.mxu0
    %889 = vmatprep.mubr.bf16.mxu0 0
    %890 = vmatmul.mubr.bf16.gmra.mxu0 %v583
    %v891 = vpop.f32.mrf.mxu0
    %v892 = vadd.f32 0.0, %v891
    %v893 = vpop.f32.mrf.mxu0
    %v894 = vpop.f32.mrf.mxu0
    %v895 = vadd.f32 0.0, %v894
    %v896 = vpop.f32.mrf.mxu0
    %897 = vmatprep.mubr.bf16.mxu0 0
    %898 = vmatmul.mubr.bf16.gmra.mxu0 %v584
    %v899 = vpop.f32.mrf.mxu0
    %v900 = vadd.f32 0.0, %v899
    %v901 = vpop.f32.mrf.mxu0
    %v902 = vpop.f32.mrf.mxu0
    %v903 = vadd.f32 0.0, %v902
    %v904 = vpop.f32.mrf.mxu0
    %905 = vdwg.mxu0
    %v906 = vmax.f32 %v652, 0.0
    %v907 = vmax.f32 %v655, 0.0
    %v908 = vmax.f32 %v660, 0.0
    %v909 = vmax.f32 %v663, 0.0
    %v910 = vmax.f32 %v668, 0.0
    %v911 = vmax.f32 %v671, 0.0
    %v912 = vmax.f32 %v676, 0.0
    %v913 = vmax.f32 %v679, 0.0
    %v914 = vmax.f32 %v684, 0.0
    %v915 = vmax.f32 %v687, 0.0
    %v916 = vmax.f32 %v692, 0.0
    %v917 = vmax.f32 %v695, 0.0
    %v918 = vmax.f32 %v700, 0.0
    %v919 = vmax.f32 %v703, 0.0
    %v920 = vmax.f32 %v708, 0.0
    %v921 = vmax.f32 %v711, 0.0
    %v922 = vmax.f32 %v716, 0.0
    %v923 = vmax.f32 %v719, 0.0
    %v924 = vmax.f32 %v724, 0.0
    %v925 = vmax.f32 %v727, 0.0
    %v926 = vmax.f32 %v732, 0.0
    %v927 = vmax.f32 %v735, 0.0
    %v928 = vmax.f32 %v740, 0.0
    %v929 = vmax.f32 %v743, 0.0
    %v930 = vmax.f32 %v748, 0.0
    %v931 = vmax.f32 %v751, 0.0
    %v932 = vmax.f32 %v756, 0.0
    %v933 = vmax.f32 %v759, 0.0
    %v934 = vmax.f32 %v764, 0.0
    %v935 = vmax.f32 %v767, 0.0
    %v936 = vmax.f32 %v772, 0.0
    %v937 = vmax.f32 %v775, 0.0
    %v938 = vmax.f32 %v780, 0.0
    %v939 = vmax.f32 %v783, 0.0
    %v940 = vmax.f32 %v788, 0.0
    %v941 = vmax.f32 %v791, 0.0
    %v942 = vmax.f32 %v796, 0.0
    %v943 = vmax.f32 %v799, 0.0
    %v944 = vmax.f32 %v804, 0.0
    %v945 = vmax.f32 %v807, 0.0
    %v946 = vmax.f32 %v812, 0.0
    %v947 = vmax.f32 %v815, 0.0
    %v948 = vmax.f32 %v820, 0.0
    %v949 = vmax.f32 %v823, 0.0
    %v950 = vmax.f32 %v828, 0.0
    %v951 = vmax.f32 %v831, 0.0
    %v952 = vmax.f32 %v836, 0.0
    %v953 = vmax.f32 %v839, 0.0
    %v954 = vmax.f32 %v844, 0.0
    %v955 = vmax.f32 %v847, 0.0
    %v956 = vmax.f32 %v852, 0.0
    %v957 = vmax.f32 %v855, 0.0
    %v958 = vmax.f32 %v860, 0.0
    %v959 = vmax.f32 %v863, 0.0
    %v960 = vmax.f32 %v868, 0.0
    %v961 = vmax.f32 %v871, 0.0
    %v962 = vmax.f32 %v876, 0.0
    %v963 = vmax.f32 %v879, 0.0
    %v964 = vmax.f32 %v884, 0.0
    %v965 = vmax.f32 %v887, 0.0
    %v966 = vmax.f32 %v892, 0.0
    %v967 = vmax.f32 %v895, 0.0
    %v968 = vmax.f32 %v900, 0.0
    %v969 = vmax.f32 %v903, 0.0
    %v971 = vcombine.high %v352, %v352
    %v973 = vunpack.c.l.s4 1983009808
    %v974 = vunpack.c.0.s8 %v973
    %v975 = vlaneseq
    %v976 = vshrl.u32 %v975, 7
    %v977 = vsub.s32 %v974, %v976
    %v978 = vrot.slane %v352, %v977
    %v980 = vunpack.c.l.s4 1983009808
    %v981 = vunpack.c.0.s8 %v980
    %v982 = vlaneseq
    %v983 = vshrl.u32 %v982, 7
    %v984 = vsub.s32 %v981, %v983
    %v985 = vrot.slane %v971, %v984
    %v986 = vcombine.high %v978, %v978
    %v987 = vcombine.high %v985, %v985
    %992 = vmatprep.subr.mxu0 0.0
    %993 = vmatpush1.msra.mxu0 %v921
    %994 = vmatprep.subr.mxu0 0.0
    %995 = vmatpush1.msra.mxu0 %v920
    %996 = vmatprep.subr.mxu0 0.0
    %997 = vmatpush1.msra.mxu0 %v919
    %998 = vmatprep.subr.mxu0 0.0
    %999 = vmatpush1.msra.mxu0 %v918
    %1000 = vmatprep.subr.mxu0 0.0
    %1001 = vmatpush1.msra.mxu0 %v917
    %1002 = vmatprep.subr.mxu0 0.0
    %1003 = vmatpush1.msra.mxu0 %v916
    %1004 = vmatprep.subr.mxu0 0.0
    %1005 = vmatpush1.msra.mxu0 %v915
    %1006 = vmatprep.subr.mxu0 0.0
    %1007 = vmatpush1.msra.mxu0 %v914
    %1008 = vmatprep.subr.mxu0 0.0
    %1009 = vmatpush1.msra.mxu0 %v913
    %1010 = vmatprep.subr.mxu0 0.0
    %1011 = vmatpush1.msra.mxu0 %v912
    %1012 = vmatprep.subr.mxu0 0.0
    %1013 = vmatpush1.msra.mxu0 %v911
    %1014 = vmatprep.subr.mxu0 0.0
    %1015 = vmatpush1.msra.mxu0 %v910
    %1016 = vmatprep.subr.mxu0 0.0
    %1017 = vmatpush1.msra.mxu0 %v909
    %1018 = vmatprep.subr.mxu0 0.0
    %1019 = vmatpush1.msra.mxu0 %v908
    %1020 = vmatprep.subr.mxu0 0.0
    %1021 = vmatpush1.msra.mxu0 %v907
    %1022 = vmatprep.subr.mxu0 0.0
    %1023 = vmatpush1.msra.mxu0 %v906
    %1024 = vmatprep.subr.mxu0 0.0
    %1025 = vmatpush2.msra.mxu0 %v937
    %1026 = vmatprep.subr.mxu0 0.0
    %1027 = vmatpush2.msra.mxu0 %v936
    %1028 = vmatprep.subr.mxu0 0.0
    %1029 = vmatpush2.msra.mxu0 %v935
    %1030 = vmatprep.subr.mxu0 0.0
    %1031 = vmatpush2.msra.mxu0 %v934
    %1032 = vmatprep.subr.mxu0 0.0
    %1033 = vmatpush2.msra.mxu0 %v933
    %1034 = vmatprep.subr.mxu0 0.0
    %1035 = vmatpush2.msra.mxu0 %v932
    %1036 = vmatprep.subr.mxu0 0.0
    %1037 = vmatpush2.msra.mxu0 %v931
    %1038 = vmatprep.subr.mxu0 0.0
    %1039 = vmatpush2.msra.mxu0 %v930
    %1040 = vmatprep.subr.mxu0 0.0
    %1041 = vmatpush2.msra.mxu0 %v929
    %1042 = vmatprep.subr.mxu0 0.0
    %1043 = vmatpush2.msra.mxu0 %v928
    %1044 = vmatprep.subr.mxu0 0.0
    %1045 = vmatpush2.msra.mxu0 %v927
    %1046 = vmatprep.subr.mxu0 0.0
    %1047 = vmatpush2.msra.mxu0 %v926
    %1048 = vmatprep.subr.mxu0 0.0
    %1049 = vmatpush2.msra.mxu0 %v925
    %1050 = vmatprep.subr.mxu0 0.0
    %1051 = vmatpush2.msra.mxu0 %v924
    %1052 = vmatprep.subr.mxu0 0.0
    %1053 = vmatpush2.msra.mxu0 %v923
    %1054 = vmatprep.subr.mxu0 0.0
    %1055 = vmatpush2.msra.mxu0 %v922
    %1056 = vmatprep.mubr.f32.mxu0 %v986
    %1057 = vmatmul.mubr.f32.gmra.mxu0 %v978
    %v1058 = vpop.f32.mrf.mxu0
    %v1059 = vadd.f32 0.0, %v1058
    %v1060 = vpop.f32.mrf.mxu0
    %1061 = vdwg.mxu0
    %1062 = vmatprep.subr.mxu0 0.0
    %1063 = vmatpush1.msra.mxu0 %v953
    %1064 = vmatprep.subr.mxu0 0.0
    %1065 = vmatpush1.msra.mxu0 %v952
    %1066 = vmatprep.subr.mxu0 0.0
    %1067 = vmatpush1.msra.mxu0 %v951
    %1068 = vmatprep.subr.mxu0 0.0
    %1069 = vmatpush1.msra.mxu0 %v950
    %1070 = vmatprep.subr.mxu0 0.0
    %1071 = vmatpush1.msra.mxu0 %v949
    %1072 = vmatprep.subr.mxu0 0.0
    %1073 = vmatpush1.msra.mxu0 %v948
    %1074 = vmatprep.subr.mxu0 0.0
    %1075 = vmatpush1.msra.mxu0 %v947
    %1076 = vmatprep.subr.mxu0 0.0
    %1077 = vmatpush1.msra.mxu0 %v946
    %1078 = vmatprep.subr.mxu0 0.0
    %1079 = vmatpush1.msra.mxu0 %v945
    %1080 = vmatprep.subr.mxu0 0.0
    %1081 = vmatpush1.msra.mxu0 %v944
    %1082 = vmatprep.subr.mxu0 0.0
    %1083 = vmatpush1.msra.mxu0 %v943
    %1084 = vmatprep.subr.mxu0 0.0
    %1085 = vmatpush1.msra.mxu0 %v942
    %1086 = vmatprep.subr.mxu0 0.0
    %1087 = vmatpush1.msra.mxu0 %v941
    %1088 = vmatprep.subr.mxu0 0.0
    %1089 = vmatpush1.msra.mxu0 %v940
    %1090 = vmatprep.subr.mxu0 0.0
    %1091 = vmatpush1.msra.mxu0 %v939
    %1092 = vmatprep.subr.mxu0 0.0
    %1093 = vmatpush1.msra.mxu0 %v938
    %1094 = vmatprep.subr.mxu0 0.0
    %1095 = vmatpush2.msra.mxu0 %v969
    %1096 = vmatprep.subr.mxu0 0.0
    %1097 = vmatpush2.msra.mxu0 %v968
    %1098 = vmatprep.subr.mxu0 0.0
    %1099 = vmatpush2.msra.mxu0 %v967
    %1100 = vmatprep.subr.mxu0 0.0
    %1101 = vmatpush2.msra.mxu0 %v966
    %1102 = vmatprep.subr.mxu0 0.0
    %1103 = vmatpush2.msra.mxu0 %v965
    %1104 = vmatprep.subr.mxu0 0.0
    %1105 = vmatpush2.msra.mxu0 %v964
    %1106 = vmatprep.subr.mxu0 0.0
    %1107 = vmatpush2.msra.mxu0 %v963
    %1108 = vmatprep.subr.mxu0 0.0
    %1109 = vmatpush2.msra.mxu0 %v962
    %1110 = vmatprep.subr.mxu0 0.0
    %1111 = vmatpush2.msra.mxu0 %v961
    %1112 = vmatprep.subr.mxu0 0.0
    %1113 = vmatpush2.msra.mxu0 %v960
    %1114 = vmatprep.subr.mxu0 0.0
    %1115 = vmatpush2.msra.mxu0 %v959
    %1116 = vmatprep.subr.mxu0 0.0
    %1117 = vmatpush2.msra.mxu0 %v958
    %1118 = vmatprep.subr.mxu0 0.0
    %1119 = vmatpush2.msra.mxu0 %v957
    %1120 = vmatprep.subr.mxu0 0.0
    %1121 = vmatpush2.msra.mxu0 %v956
    %1122 = vmatprep.subr.mxu0 0.0
    %1123 = vmatpush2.msra.mxu0 %v955
    %1124 = vmatprep.subr.mxu0 0.0
    %1125 = vmatpush2.msra.mxu0 %v954
    %1126 = vmatprep.mubr.f32.mxu0 %v987
    %1127 = vmatmul.mubr.f32.gmra.mxu0 %v985
    %v1128 = vpop.f32.mrf.mxu0
    %v1129 = vadd.f32 %v1059, %v1128
    %v1130 = vpop.f32.mrf.mxu0
    %1131 = vdwg.mxu0
    %v1132 = vpack.c.bf16 %v1129, %v1129
    %v1133 = vpack.c.bf16 %v69, %v68
    %v1134 = vpack.c.bf16 %v71, %v70
    %v1135 = vpack.c.bf16 %v73, %v72
    %v1136 = vpack.c.bf16 %v75, %v74
    %v1137 = vpack.c.bf16 %v77, %v76
    %v1138 = vpack.c.bf16 %v79, %v78
    %v1139 = vpack.c.bf16 %v81, %v80
    %v1140 = vpack.c.bf16 %v83, %v82
    %v1142 = vlaneseq
    %v1143 = vshrl.u32 %v1142, 7
    %v1144 = vsub.s32 0, %v1143
    %v1145 = vrot.slane %v84, %v1144
    %1147 = vmatprep.subr.bf16.mxu0 0
    %1148 = vmatpush1.bf16.msra.mxu0 %v1140
    %1149 = vmatprep.subr.bf16.mxu0 0
    %1150 = vmatpush1.bf16.msra.mxu0 %v1139
    %1151 = vmatprep.subr.bf16.mxu0 0
    %1152 = vmatpush1.bf16.msra.mxu0 %v1138
    %1153 = vmatprep.subr.bf16.mxu0 0
    %1154 = vmatpush1.bf16.msra.mxu0 %v1137
    %1155 = vmatprep.subr.bf16.mxu0 0
    %1156 = vmatpush1.bf16.msra.mxu0 %v1136
    %1157 = vmatprep.subr.bf16.mxu0 0
    %1158 = vmatpush1.bf16.msra.mxu0 %v1135
    %1159 = vmatprep.subr.bf16.mxu0 0
    %1160 = vmatpush1.bf16.msra.mxu0 %v1134
    %1161 = vmatprep.subr.bf16.mxu0 0
    %1162 = vmatpush1.bf16.msra.mxu0 %v1133
    %1163 = vmatprep.subr.bf16.mxu0 0
    %1164 = vmatpush2.bf16.msra.mxu0 0
    %1165 = vmatprep.subr.bf16.mxu0 0
    %1166 = vmatpush2.bf16.msra.mxu0 0
    %1167 = vmatprep.subr.bf16.mxu0 0
    %1168 = vmatpush2.bf16.msra.mxu0 0
    %1169 = vmatprep.subr.bf16.mxu0 0
    %1170 = vmatpush2.bf16.msra.mxu0 0
    %1171 = vmatprep.subr.bf16.mxu0 0
    %1172 = vmatpush2.bf16.msra.mxu0 0
    %1173 = vmatprep.subr.bf16.mxu0 0
    %1174 = vmatpush2.bf16.msra.mxu0 0
    %1175 = vmatprep.subr.bf16.mxu0 0
    %1176 = vmatpush2.bf16.msra.mxu0 0
    %1177 = vmatprep.subr.bf16.mxu0 0
    %1178 = vmatpush2.bf16.msra.mxu0 0
    %1179 = vmatprep.mubr.bf16.mxu0 0
    %1180 = vmatmul.mubr.bf16.gmra.mxu0 %v1132
    %v1181 = vpop.f32.mrf.mxu0
    %v1182 = vadd.f32 %v1145, %v1181
    %v1183 = vpop.f32.mrf.mxu0
    %v1184 = vpop.f32.mrf.mxu0
    %v1185 = vpop.f32.mrf.mxu0
    %1186 = vdwg.mxu0
    %v1187 = vmax.f32 %v1182, 0.0
    %v1188 = vpack.c.bf16 %v1187, %v1187
    %v1189 = vpack.c.bf16 %v86, %v85
    %v1190 = vpack.c.bf16 %v88, %v87
    %v1191 = vpack.c.bf16 %v90, %v89
    %v1192 = vpack.c.bf16 %v92, %v91
    %v1193 = vpack.c.bf16 %v94, %v93
    %v1194 = vpack.c.bf16 %v96, %v95
    %v1195 = vpack.c.bf16 %v98, %v97
    %v1196 = vpack.c.bf16 %v100, %v99
    %v1198 = vlaneseq
    %v1199 = vshrl.u32 %v1198, 7
    %v1200 = vsub.s32 0, %v1199
    %v1201 = vrot.slane %v101, %v1200
    %1203 = vmatprep.subr.bf16.mxu0 0
    %1204 = vmatpush1.bf16.msra.mxu0 %v1196
    %1205 = vmatprep.subr.bf16.mxu0 0
    %1206 = vmatpush1.bf16.msra.mxu0 %v1195
    %1207 = vmatprep.subr.bf16.mxu0 0
    %1208 = vmatpush1.bf16.msra.mxu0 %v1194
    %1209 = vmatprep.subr.bf16.mxu0 0
    %1210 = vmatpush1.bf16.msra.mxu0 %v1193
    %1211 = vmatprep.subr.bf16.mxu0 0
    %1212 = vmatpush1.bf16.msra.mxu0 %v1192
    %1213 = vmatprep.subr.bf16.mxu0 0
    %1214 = vmatpush1.bf16.msra.mxu0 %v1191
    %1215 = vmatprep.subr.bf16.mxu0 0
    %1216 = vmatpush1.bf16.msra.mxu0 %v1190
    %1217 = vmatprep.subr.bf16.mxu0 0
    %1218 = vmatpush1.bf16.msra.mxu0 %v1189
    %1219 = vmatprep.subr.bf16.mxu0 0
    %1220 = vmatpush2.bf16.msra.mxu0 0
    %1221 = vmatprep.subr.bf16.mxu0 0
    %1222 = vmatpush2.bf16.msra.mxu0 0
    %1223 = vmatprep.subr.bf16.mxu0 0
    %1224 = vmatpush2.bf16.msra.mxu0 0
    %1225 = vmatprep.subr.bf16.mxu0 0
    %1226 = vmatpush2.bf16.msra.mxu0 0
    %1227 = vmatprep.subr.bf16.mxu0 0
    %1228 = vmatpush2.bf16.msra.mxu0 0
    %1229 = vmatprep.subr.bf16.mxu0 0
    %1230 = vmatpush2.bf16.msra.mxu0 0
    %1231 = vmatprep.subr.bf16.mxu0 0
    %1232 = vmatpush2.bf16.msra.mxu0 0
    %1233 = vmatprep.subr.bf16.mxu0 0
    %1234 = vmatpush2.bf16.msra.mxu0 0
    %1235 = vmatprep.mubr.bf16.mxu0 0
    %1236 = vmatmul.mubr.bf16.gmra.mxu0 %v1188
    %v1237 = vpop.f32.mrf.mxu0
    %v1238 = vadd.f32 %v1201, %v1237
    %v1239 = vpop.f32.mrf.mxu0
    %v1240 = vpop.f32.mrf.mxu0
    %v1241 = vpop.f32.mrf.mxu0
    %1242 = vdwg.mxu0
    %v1243 = vld [vmem:[%s1] sm:$0xf]
    %v1244 = vld [vmem:[%s1 + $0x4] sm:$0xf]
    %v1245 = vld [vmem:[%s1 + $0x8] sm:$0xf]
    %v1246 = vld [vmem:[%s1 + $0xc] sm:$0xf]
    %v1247 = vld [vmem:[%s1 + $0x10] sm:$0xf]
    %v1248 = vld [vmem:[%s1 + $0x14] sm:$0xf]
    %v1249 = vld [vmem:[%s1 + $0x18] sm:$0xf]
    %v1250 = vld [vmem:[%s1 + $0x1c] sm:$0xf]
    %v1251 = vld [vmem:[%s1 + $0x20] sm:$0xf]
    %v1252 = vld [vmem:[%s1 + $0x24] sm:$0xf]
    %v1253 = vld [vmem:[%s1 + $0x28] sm:$0xf]
    %v1254 = vld [vmem:[%s1 + $0x2c] sm:$0xf]
    %v1255 = vld [vmem:[%s1 + $0x30] sm:$0xf]
    %v1256 = vld [vmem:[%s1 + $0x34] sm:$0xf]
    %v1257 = vld [vmem:[%s1 + $0x38] sm:$0xf]
    %v1258 = vld [vmem:[%s1 + $0x3c] sm:$0xf]
    %v1259 = vld [vmem:[%s1 + $0x40] sm:$0xf]
    %v1260 = vld [vmem:[%s1 + $0x44] sm:$0xf]
    %v1261 = vld [vmem:[%s1 + $0x48] sm:$0xf]
    %v1262 = vld [vmem:[%s1 + $0x4c] sm:$0xf]
    %v1263 = vld [vmem:[%s1 + $0x50] sm:$0xf]
    %v1264 = vld [vmem:[%s1 + $0x54] sm:$0xf]
    %v1265 = vld [vmem:[%s1 + $0x58] sm:$0xf]
    %v1266 = vld [vmem:[%s1 + $0x5c] sm:$0xf]
    %v1267 = vld [vmem:[%s1 + $0x60] sm:$0xf]
    %v1268 = vld [vmem:[%s1 + $0x64] sm:$0xf]
    %v1269 = vld [vmem:[%s1 + $0x68] sm:$0xf]
    %v1270 = vld [vmem:[%s1 + $0x6c] sm:$0xf]
    %v1271 = vld [vmem:[%s1 + $0x70] sm:$0xf]
    %v1272 = vld [vmem:[%s1 + $0x74] sm:$0xf]
    %v1273 = vld [vmem:[%s1 + $0x78] sm:$0xf]
    %v1274 = vld [vmem:[%s1 + $0x7c] sm:$0xf]
    %v1275 = vld [vmem:[%s1 + $0x80] sm:$0xf]
    %v1276 = vld [vmem:[%s1 + $0x84] sm:$0xf]
    %v1277 = vld [vmem:[%s1 + $0x88] sm:$0xf]
    %v1278 = vld [vmem:[%s1 + $0x8c] sm:$0xf]
    %v1279 = vld [vmem:[%s1 + $0x90] sm:$0xf]
    %v1280 = vld [vmem:[%s1 + $0x94] sm:$0xf]
    %v1281 = vld [vmem:[%s1 + $0x98] sm:$0xf]
    %v1282 = vld [vmem:[%s1 + $0x9c] sm:$0xf]
    %v1283 = vld [vmem:[%s1 + $0xa0] sm:$0xf]
    %v1284 = vld [vmem:[%s1 + $0xa4] sm:$0xf]
    %v1285 = vld [vmem:[%s1 + $0xa8] sm:$0xf]
    %v1286 = vld [vmem:[%s1 + $0xac] sm:$0xf]
    %v1287 = vld [vmem:[%s1 + $0xb0] sm:$0xf]
    %v1288 = vld [vmem:[%s1 + $0xb4] sm:$0xf]
    %v1289 = vld [vmem:[%s1 + $0xb8] sm:$0xf]
    %v1290 = vld [vmem:[%s1 + $0xbc] sm:$0xf]
    %v1291 = vld [vmem:[%s1 + $0xc0] sm:$0xf]
    %v1292 = vld [vmem:[%s1 + $0xc4] sm:$0xf]
    %v1293 = vld [vmem:[%s1 + $0xc8] sm:$0xf]
    %v1294 = vld [vmem:[%s1 + $0xcc] sm:$0xf]
    %v1295 = vld [vmem:[%s1 + $0xd0] sm:$0xf]
    %v1296 = vld [vmem:[%s1 + $0xd4] sm:$0xf]
    %v1297 = vld [vmem:[%s1 + $0xd8] sm:$0xf]
    %v1298 = vld [vmem:[%s1 + $0xdc] sm:$0xf]
    %v1299 = vld [vmem:[%s1 + $0xe0] sm:$0xf]
    %v1300 = vld [vmem:[%s1 + $0xe4] sm:$0xf]
    %v1301 = vld [vmem:[%s1 + $0xe8] sm:$0xf]
    %v1302 = vld [vmem:[%s1 + $0xec] sm:$0xf]
    %v1303 = vld [vmem:[%s1 + $0xf0] sm:$0xf]
    %v1304 = vld [vmem:[%s1 + $0xf4] sm:$0xf]
    %v1305 = vld [vmem:[%s1 + $0xf8] sm:$0xf]
    %v1306 = vld [vmem:[%s1 + $0xfc] sm:$0xf]
    %v1307 = vpack.c.bf16 %v151, %v150
    %v1308 = vpack.c.bf16 %v153, %v152
    %v1309 = vpack.c.bf16 %v155, %v154
    %v1310 = vpack.c.bf16 %v157, %v156
    %v1311 = vpack.c.bf16 %v159, %v158
    %v1312 = vpack.c.bf16 %v161, %v160
    %v1313 = vpack.c.bf16 %v163, %v162
    %v1314 = vpack.c.bf16 %v165, %v164
    %v1379 = vunpack.c.l.b16 %v1243
    %v1380 = vunpack.c.l.b16 %v1244
    %v1381 = vunpack.c.l.b16 %v1245
    %v1382 = vunpack.c.l.b16 %v1246
    %v1383 = vunpack.c.l.b16 %v1247
    %v1384 = vunpack.c.l.b16 %v1248
    %v1385 = vunpack.c.l.b16 %v1249
    %v1386 = vunpack.c.l.b16 %v1250
    %v1387 = vunpack.c.l.b16 %v1251
    %v1388 = vunpack.c.l.b16 %v1252
    %v1389 = vunpack.c.l.b16 %v1253
    %v1390 = vunpack.c.l.b16 %v1254
    %v1391 = vunpack.c.l.b16 %v1255
    %v1392 = vunpack.c.l.b16 %v1256
    %v1393 = vunpack.c.l.b16 %v1257
    %v1394 = vunpack.c.l.b16 %v1258
    %v1395 = vunpack.c.l.b16 %v1259
    %v1396 = vunpack.c.l.b16 %v1260
    %v1397 = vunpack.c.l.b16 %v1261
    %v1398 = vunpack.c.l.b16 %v1262
    %v1399 = vunpack.c.l.b16 %v1263
    %v1400 = vunpack.c.l.b16 %v1264
    %v1401 = vunpack.c.l.b16 %v1265
    %v1402 = vunpack.c.l.b16 %v1266
    %v1403 = vunpack.c.l.b16 %v1267
    %v1404 = vunpack.c.l.b16 %v1268
    %v1405 = vunpack.c.l.b16 %v1269
    %v1406 = vunpack.c.l.b16 %v1270
    %v1407 = vunpack.c.l.b16 %v1271
    %v1408 = vunpack.c.l.b16 %v1272
    %v1409 = vunpack.c.l.b16 %v1273
    %v1410 = vunpack.c.l.b16 %v1274
    %v1411 = vunpack.c.l.b16 %v1275
    %v1412 = vunpack.c.l.b16 %v1276
    %v1413 = vunpack.c.l.b16 %v1277
    %v1414 = vunpack.c.l.b16 %v1278
    %v1415 = vunpack.c.l.b16 %v1279
    %v1416 = vunpack.c.l.b16 %v1280
    %v1417 = vunpack.c.l.b16 %v1281
    %v1418 = vunpack.c.l.b16 %v1282
    %v1419 = vunpack.c.l.b16 %v1283
    %v1420 = vunpack.c.l.b16 %v1284
    %v1421 = vunpack.c.l.b16 %v1285
    %v1422 = vunpack.c.l.b16 %v1286
    %v1423 = vunpack.c.l.b16 %v1287
    %v1424 = vunpack.c.l.b16 %v1288
    %v1425 = vunpack.c.l.b16 %v1289
    %v1426 = vunpack.c.l.b16 %v1290
    %v1427 = vunpack.c.l.b16 %v1291
    %v1428 = vunpack.c.l.b16 %v1292
    %v1429 = vunpack.c.l.b16 %v1293
    %v1430 = vunpack.c.l.b16 %v1294
    %v1431 = vunpack.c.l.b16 %v1295
    %v1432 = vunpack.c.l.b16 %v1296
    %v1433 = vunpack.c.l.b16 %v1297
    %v1434 = vunpack.c.l.b16 %v1298
    %v1435 = vunpack.c.l.b16 %v1299
    %v1436 = vunpack.c.l.b16 %v1300
    %v1437 = vunpack.c.l.b16 %v1301
    %v1438 = vunpack.c.l.b16 %v1302
    %v1439 = vunpack.c.l.b16 %v1303
    %v1440 = vunpack.c.l.b16 %v1304
    %v1441 = vunpack.c.l.b16 %v1305
    %v1442 = vunpack.c.l.b16 %v1306
    %v1443 = vpack.c.b16 %v1380, %v1379
    %v1444 = vpack.c.b16 %v1382, %v1381
    %v1445 = vpack.c.b16 %v1384, %v1383
    %v1446 = vpack.c.b16 %v1386, %v1385
    %v1447 = vpack.c.b16 %v1388, %v1387
    %v1448 = vpack.c.b16 %v1390, %v1389
    %v1449 = vpack.c.b16 %v1392, %v1391
    %v1450 = vpack.c.b16 %v1394, %v1393
    %v1451 = vpack.c.b16 %v1396, %v1395
    %v1452 = vpack.c.b16 %v1398, %v1397
    %v1453 = vpack.c.b16 %v1400, %v1399
    %v1454 = vpack.c.b16 %v1402, %v1401
    %v1455 = vpack.c.b16 %v1404, %v1403
    %v1456 = vpack.c.b16 %v1406, %v1405
    %v1457 = vpack.c.b16 %v1408, %v1407
    %v1458 = vpack.c.b16 %v1410, %v1409
    %v1459 = vpack.c.b16 %v1412, %v1411
    %v1460 = vpack.c.b16 %v1414, %v1413
    %v1461 = vpack.c.b16 %v1416, %v1415
    %v1462 = vpack.c.b16 %v1418, %v1417
    %v1463 = vpack.c.b16 %v1420, %v1419
    %v1464 = vpack.c.b16 %v1422, %v1421
    %v1465 = vpack.c.b16 %v1424, %v1423
    %v1466 = vpack.c.b16 %v1426, %v1425
    %v1467 = vpack.c.b16 %v1428, %v1427
    %v1468 = vpack.c.b16 %v1430, %v1429
    %v1469 = vpack.c.b16 %v1432, %v1431
    %v1470 = vpack.c.b16 %v1434, %v1433
    %v1471 = vpack.c.b16 %v1436, %v1435
    %v1472 = vpack.c.b16 %v1438, %v1437
    %v1473 = vpack.c.b16 %v1440, %v1439
    %v1474 = vpack.c.b16 %v1442, %v1441
    %1507 = vmatprep.subr.bf16.mxu0 0
    %1508 = vmatpush1.bf16.msra.mxu0 %v1314
    %1509 = vmatprep.subr.bf16.mxu0 0
    %1510 = vmatpush1.bf16.msra.mxu0 %v1313
    %1511 = vmatprep.subr.bf16.mxu0 0
    %1512 = vmatpush1.bf16.msra.mxu0 %v1312
    %1513 = vmatprep.subr.bf16.mxu0 0
    %1514 = vmatpush1.bf16.msra.mxu0 %v1311
    %1515 = vmatprep.subr.bf16.mxu0 0
    %1516 = vmatpush1.bf16.msra.mxu0 %v1310
    %1517 = vmatprep.subr.bf16.mxu0 0
    %1518 = vmatpush1.bf16.msra.mxu0 %v1309
    %1519 = vmatprep.subr.bf16.mxu0 0
    %1520 = vmatpush1.bf16.msra.mxu0 %v1308
    %1521 = vmatprep.subr.bf16.mxu0 0
    %1522 = vmatpush1.bf16.msra.mxu0 %v1307
    %1523 = vmatprep.subr.bf16.mxu0 0
    %1524 = vmatpush2.bf16.msra.mxu0 0
    %1525 = vmatprep.subr.bf16.mxu0 0
    %1526 = vmatpush2.bf16.msra.mxu0 0
    %1527 = vmatprep.subr.bf16.mxu0 0
    %1528 = vmatpush2.bf16.msra.mxu0 0
    %1529 = vmatprep.subr.bf16.mxu0 0
    %1530 = vmatpush2.bf16.msra.mxu0 0
    %1531 = vmatprep.subr.bf16.mxu0 0
    %1532 = vmatpush2.bf16.msra.mxu0 0
    %1533 = vmatprep.subr.bf16.mxu0 0
    %1534 = vmatpush2.bf16.msra.mxu0 0
    %1535 = vmatprep.subr.bf16.mxu0 0
    %1536 = vmatpush2.bf16.msra.mxu0 0
    %1537 = vmatprep.subr.bf16.mxu0 0
    %1538 = vmatpush2.bf16.msra.mxu0 0
    %1539 = vmatprep.mubr.bf16.mxu0 0
    %1540 = vmatmul.mubr.bf16.gmra.mxu0 %v1443
    %v1541 = vpop.f32.mrf.mxu0
    %v1542 = vadd.f32 0.0, %v1541
    %v1543 = vpop.f32.mrf.mxu0
    %v1544 = vpop.f32.mrf.mxu0
    %v1545 = vadd.f32 0.0, %v1544
    %v1546 = vpop.f32.mrf.mxu0
    %1547 = vmatprep.mubr.bf16.mxu0 0
    %1548 = vmatmul.mubr.bf16.gmra.mxu0 %v1444
    %v1549 = vpop.f32.mrf.mxu0
    %v1550 = vadd.f32 0.0, %v1549
    %v1551 = vpop.f32.mrf.mxu0
    %v1552 = vpop.f32.mrf.mxu0
    %v1553 = vadd.f32 0.0, %v1552
    %v1554 = vpop.f32.mrf.mxu0
    %1555 = vmatprep.mubr.bf16.mxu0 0
    %1556 = vmatmul.mubr.bf16.gmra.mxu0 %v1445
    %v1557 = vpop.f32.mrf.mxu0
    %v1558 = vadd.f32 0.0, %v1557
    %v1559 = vpop.f32.mrf.mxu0
    %v1560 = vpop.f32.mrf.mxu0
    %v1561 = vadd.f32 0.0, %v1560
    %v1562 = vpop.f32.mrf.mxu0
    %1563 = vmatprep.mubr.bf16.mxu0 0
    %1564 = vmatmul.mubr.bf16.gmra.mxu0 %v1446
    %v1565 = vpop.f32.mrf.mxu0
    %v1566 = vadd.f32 0.0, %v1565
    %v1567 = vpop.f32.mrf.mxu0
    %v1568 = vpop.f32.mrf.mxu0
    %v1569 = vadd.f32 0.0, %v1568
    %v1570 = vpop.f32.mrf.mxu0
    %1571 = vmatprep.mubr.bf16.mxu0 0
    %1572 = vmatmul.mubr.bf16.gmra.mxu0 %v1447
    %v1573 = vpop.f32.mrf.mxu0
    %v1574 = vadd.f32 0.0, %v1573
    %v1575 = vpop.f32.mrf.mxu0
    %v1576 = vpop.f32.mrf.mxu0
    %v1577 = vadd.f32 0.0, %v1576
    %v1578 = vpop.f32.mrf.mxu0
    %1579 = vmatprep.mubr.bf16.mxu0 0
    %1580 = vmatmul.mubr.bf16.gmra.mxu0 %v1448
    %v1581 = vpop.f32.mrf.mxu0
    %v1582 = vadd.f32 0.0, %v1581
    %v1583 = vpop.f32.mrf.mxu0
    %v1584 = vpop.f32.mrf.mxu0
    %v1585 = vadd.f32 0.0, %v1584
    %v1586 = vpop.f32.mrf.mxu0
    %1587 = vmatprep.mubr.bf16.mxu0 0
    %1588 = vmatmul.mubr.bf16.gmra.mxu0 %v1449
    %v1589 = vpop.f32.mrf.mxu0
    %v1590 = vadd.f32 0.0, %v1589
    %v1591 = vpop.f32.mrf.mxu0
    %v1592 = vpop.f32.mrf.mxu0
    %v1593 = vadd.f32 0.0, %v1592
    %v1594 = vpop.f32.mrf.mxu0
    %1595 = vmatprep.mubr.bf16.mxu0 0
    %1596 = vmatmul.mubr.bf16.gmra.mxu0 %v1450
    %v1597 = vpop.f32.mrf.mxu0
    %v1598 = vadd.f32 0.0, %v1597
    %v1599 = vpop.f32.mrf.mxu0
    %v1600 = vpop.f32.mrf.mxu0
    %v1601 = vadd.f32 0.0, %v1600
    %v1602 = vpop.f32.mrf.mxu0
    %1603 = vmatprep.mubr.bf16.mxu0 0
    %1604 = vmatmul.mubr.bf16.gmra.mxu0 %v1451
    %v1605 = vpop.f32.mrf.mxu0
    %v1606 = vadd.f32 0.0, %v1605
    %v1607 = vpop.f32.mrf.mxu0
    %v1608 = vpop.f32.mrf.mxu0
    %v1609 = vadd.f32 0.0, %v1608
    %v1610 = vpop.f32.mrf.mxu0
    %1611 = vmatprep.mubr.bf16.mxu0 0
    %1612 = vmatmul.mubr.bf16.gmra.mxu0 %v1452
    %v1613 = vpop.f32.mrf.mxu0
    %v1614 = vadd.f32 0.0, %v1613
    %v1615 = vpop.f32.mrf.mxu0
    %v1616 = vpop.f32.mrf.mxu0
    %v1617 = vadd.f32 0.0, %v1616
    %v1618 = vpop.f32.mrf.mxu0
    %1619 = vmatprep.mubr.bf16.mxu0 0
    %1620 = vmatmul.mubr.bf16.gmra.mxu0 %v1453
    %v1621 = vpop.f32.mrf.mxu0
    %v1622 = vadd.f32 0.0, %v1621
    %v1623 = vpop.f32.mrf.mxu0
    %v1624 = vpop.f32.mrf.mxu0
    %v1625 = vadd.f32 0.0, %v1624
    %v1626 = vpop.f32.mrf.mxu0
    %1627 = vmatprep.mubr.bf16.mxu0 0
    %1628 = vmatmul.mubr.bf16.gmra.mxu0 %v1454
    %v1629 = vpop.f32.mrf.mxu0
    %v1630 = vadd.f32 0.0, %v1629
    %v1631 = vpop.f32.mrf.mxu0
    %v1632 = vpop.f32.mrf.mxu0
    %v1633 = vadd.f32 0.0, %v1632
    %v1634 = vpop.f32.mrf.mxu0
    %1635 = vmatprep.mubr.bf16.mxu0 0
    %1636 = vmatmul.mubr.bf16.gmra.mxu0 %v1455
    %v1637 = vpop.f32.mrf.mxu0
    %v1638 = vadd.f32 0.0, %v1637
    %v1639 = vpop.f32.mrf.mxu0
    %v1640 = vpop.f32.mrf.mxu0
    %v1641 = vadd.f32 0.0, %v1640
    %v1642 = vpop.f32.mrf.mxu0
    %1643 = vmatprep.mubr.bf16.mxu0 0
    %1644 = vmatmul.mubr.bf16.gmra.mxu0 %v1456
    %v1645 = vpop.f32.mrf.mxu0
    %v1646 = vadd.f32 0.0, %v1645
    %v1647 = vpop.f32.mrf.mxu0
    %v1648 = vpop.f32.mrf.mxu0
    %v1649 = vadd.f32 0.0, %v1648
    %v1650 = vpop.f32.mrf.mxu0
    %1651 = vmatprep.mubr.bf16.mxu0 0
    %1652 = vmatmul.mubr.bf16.gmra.mxu0 %v1457
    %v1653 = vpop.f32.mrf.mxu0
    %v1654 = vadd.f32 0.0, %v1653
    %v1655 = vpop.f32.mrf.mxu0
    %v1656 = vpop.f32.mrf.mxu0
    %v1657 = vadd.f32 0.0, %v1656
    %v1658 = vpop.f32.mrf.mxu0
    %1659 = vmatprep.mubr.bf16.mxu0 0
    %1660 = vmatmul.mubr.bf16.gmra.mxu0 %v1458
    %v1661 = vpop.f32.mrf.mxu0
    %v1662 = vadd.f32 0.0, %v1661
    %v1663 = vpop.f32.mrf.mxu0
    %v1664 = vpop.f32.mrf.mxu0
    %v1665 = vadd.f32 0.0, %v1664
    %v1666 = vpop.f32.mrf.mxu0
    %1667 = vmatprep.mubr.bf16.mxu0 0
    %1668 = vmatmul.mubr.bf16.gmra.mxu0 %v1459
    %v1669 = vpop.f32.mrf.mxu0
    %v1670 = vadd.f32 0.0, %v1669
    %v1671 = vpop.f32.mrf.mxu0
    %v1672 = vpop.f32.mrf.mxu0
    %v1673 = vadd.f32 0.0, %v1672
    %v1674 = vpop.f32.mrf.mxu0
    %1675 = vmatprep.mubr.bf16.mxu0 0
    %1676 = vmatmul.mubr.bf16.gmra.mxu0 %v1460
    %v1677 = vpop.f32.mrf.mxu0
    %v1678 = vadd.f32 0.0, %v1677
    %v1679 = vpop.f32.mrf.mxu0
    %v1680 = vpop.f32.mrf.mxu0
    %v1681 = vadd.f32 0.0, %v1680
    %v1682 = vpop.f32.mrf.mxu0
    %1683 = vmatprep.mubr.bf16.mxu0 0
    %1684 = vmatmul.mubr.bf16.gmra.mxu0 %v1461
    %v1685 = vpop.f32.mrf.mxu0
    %v1686 = vadd.f32 0.0, %v1685
    %v1687 = vpop.f32.mrf.mxu0
    %v1688 = vpop.f32.mrf.mxu0
    %v1689 = vadd.f32 0.0, %v1688
    %v1690 = vpop.f32.mrf.mxu0
    %1691 = vmatprep.mubr.bf16.mxu0 0
    %1692 = vmatmul.mubr.bf16.gmra.mxu0 %v1462
    %v1693 = vpop.f32.mrf.mxu0
    %v1694 = vadd.f32 0.0, %v1693
    %v1695 = vpop.f32.mrf.mxu0
    %v1696 = vpop.f32.mrf.mxu0
    %v1697 = vadd.f32 0.0, %v1696
    %v1698 = vpop.f32.mrf.mxu0
    %1699 = vmatprep.mubr.bf16.mxu0 0
    %1700 = vmatmul.mubr.bf16.gmra.mxu0 %v1463
    %v1701 = vpop.f32.mrf.mxu0
    %v1702 = vadd.f32 0.0, %v1701
    %v1703 = vpop.f32.mrf.mxu0
    %v1704 = vpop.f32.mrf.mxu0
    %v1705 = vadd.f32 0.0, %v1704
    %v1706 = vpop.f32.mrf.mxu0
    %1707 = vmatprep.mubr.bf16.mxu0 0
    %1708 = vmatmul.mubr.bf16.gmra.mxu0 %v1464
    %v1709 = vpop.f32.mrf.mxu0
    %v1710 = vadd.f32 0.0, %v1709
    %v1711 = vpop.f32.mrf.mxu0
    %v1712 = vpop.f32.mrf.mxu0
    %v1713 = vadd.f32 0.0, %v1712
    %v1714 = vpop.f32.mrf.mxu0
    %1715 = vmatprep.mubr.bf16.mxu0 0
    %1716 = vmatmul.mubr.bf16.gmra.mxu0 %v1465
    %v1717 = vpop.f32.mrf.mxu0
    %v1718 = vadd.f32 0.0, %v1717
    %v1719 = vpop.f32.mrf.mxu0
    %v1720 = vpop.f32.mrf.mxu0
    %v1721 = vadd.f32 0.0, %v1720
    %v1722 = vpop.f32.mrf.mxu0
    %1723 = vmatprep.mubr.bf16.mxu0 0
    %1724 = vmatmul.mubr.bf16.gmra.mxu0 %v1466
    %v1725 = vpop.f32.mrf.mxu0
    %v1726 = vadd.f32 0.0, %v1725
    %v1727 = vpop.f32.mrf.mxu0
    %v1728 = vpop.f32.mrf.mxu0
    %v1729 = vadd.f32 0.0, %v1728
    %v1730 = vpop.f32.mrf.mxu0
    %1731 = vmatprep.mubr.bf16.mxu0 0
    %1732 = vmatmul.mubr.bf16.gmra.mxu0 %v1467
    %v1733 = vpop.f32.mrf.mxu0
    %v1734 = vadd.f32 0.0, %v1733
    %v1735 = vpop.f32.mrf.mxu0
    %v1736 = vpop.f32.mrf.mxu0
    %v1737 = vadd.f32 0.0, %v1736
    %v1738 = vpop.f32.mrf.mxu0
    %1739 = vmatprep.mubr.bf16.mxu0 0
    %1740 = vmatmul.mubr.bf16.gmra.mxu0 %v1468
    %v1741 = vpop.f32.mrf.mxu0
    %v1742 = vadd.f32 0.0, %v1741
    %v1743 = vpop.f32.mrf.mxu0
    %v1744 = vpop.f32.mrf.mxu0
    %v1745 = vadd.f32 0.0, %v1744
    %v1746 = vpop.f32.mrf.mxu0
    %1747 = vmatprep.mubr.bf16.mxu0 0
    %1748 = vmatmul.mubr.bf16.gmra.mxu0 %v1469
    %v1749 = vpop.f32.mrf.mxu0
    %v1750 = vadd.f32 0.0, %v1749
    %v1751 = vpop.f32.mrf.mxu0
    %v1752 = vpop.f32.mrf.mxu0
    %v1753 = vadd.f32 0.0, %v1752
    %v1754 = vpop.f32.mrf.mxu0
    %1755 = vmatprep.mubr.bf16.mxu0 0
    %1756 = vmatmul.mubr.bf16.gmra.mxu0 %v1470
    %v1757 = vpop.f32.mrf.mxu0
    %v1758 = vadd.f32 0.0, %v1757
    %v1759 = vpop.f32.mrf.mxu0
    %v1760 = vpop.f32.mrf.mxu0
    %v1761 = vadd.f32 0.0, %v1760
    %v1762 = vpop.f32.mrf.mxu0
    %1763 = vmatprep.mubr.bf16.mxu0 0
    %1764 = vmatmul.mubr.bf16.gmra.mxu0 %v1471
    %v1765 = vpop.f32.mrf.mxu0
    %v1766 = vadd.f32 0.0, %v1765
    %v1767 = vpop.f32.mrf.mxu0
    %v1768 = vpop.f32.mrf.mxu0
    %v1769 = vadd.f32 0.0, %v1768
    %v1770 = vpop.f32.mrf.mxu0
    %1771 = vmatprep.mubr.bf16.mxu0 0
    %1772 = vmatmul.mubr.bf16.gmra.mxu0 %v1472
    %v1773 = vpop.f32.mrf.mxu0
    %v1774 = vadd.f32 0.0, %v1773
    %v1775 = vpop.f32.mrf.mxu0
    %v1776 = vpop.f32.mrf.mxu0
    %v1777 = vadd.f32 0.0, %v1776
    %v1778 = vpop.f32.mrf.mxu0
    %1779 = vmatprep.mubr.bf16.mxu0 0
    %1780 = vmatmul.mubr.bf16.gmra.mxu0 %v1473
    %v1781 = vpop.f32.mrf.mxu0
    %v1782 = vadd.f32 0.0, %v1781
    %v1783 = vpop.f32.mrf.mxu0
    %v1784 = vpop.f32.mrf.mxu0
    %v1785 = vadd.f32 0.0, %v1784
    %v1786 = vpop.f32.mrf.mxu0
    %1787 = vmatprep.mubr.bf16.mxu0 0
    %1788 = vmatmul.mubr.bf16.gmra.mxu0 %v1474
    %v1789 = vpop.f32.mrf.mxu0
    %v1790 = vadd.f32 0.0, %v1789
    %v1791 = vpop.f32.mrf.mxu0
    %v1792 = vpop.f32.mrf.mxu0
    %v1793 = vadd.f32 0.0, %v1792
    %v1794 = vpop.f32.mrf.mxu0
    %1795 = vdwg.mxu0
    %v1796 = vmax.f32 %v1542, 0.0
    %v1797 = vmax.f32 %v1545, 0.0
    %v1798 = vmax.f32 %v1550, 0.0
    %v1799 = vmax.f32 %v1553, 0.0
    %v1800 = vmax.f32 %v1558, 0.0
    %v1801 = vmax.f32 %v1561, 0.0
    %v1802 = vmax.f32 %v1566, 0.0
    %v1803 = vmax.f32 %v1569, 0.0
    %v1804 = vmax.f32 %v1574, 0.0
    %v1805 = vmax.f32 %v1577, 0.0
    %v1806 = vmax.f32 %v1582, 0.0
    %v1807 = vmax.f32 %v1585, 0.0
    %v1808 = vmax.f32 %v1590, 0.0
    %v1809 = vmax.f32 %v1593, 0.0
    %v1810 = vmax.f32 %v1598, 0.0
    %v1811 = vmax.f32 %v1601, 0.0
    %v1812 = vmax.f32 %v1606, 0.0
    %v1813 = vmax.f32 %v1609, 0.0
    %v1814 = vmax.f32 %v1614, 0.0
    %v1815 = vmax.f32 %v1617, 0.0
    %v1816 = vmax.f32 %v1622, 0.0
    %v1817 = vmax.f32 %v1625, 0.0
    %v1818 = vmax.f32 %v1630, 0.0
    %v1819 = vmax.f32 %v1633, 0.0
    %v1820 = vmax.f32 %v1638, 0.0
    %v1821 = vmax.f32 %v1641, 0.0
    %v1822 = vmax.f32 %v1646, 0.0
    %v1823 = vmax.f32 %v1649, 0.0
    %v1824 = vmax.f32 %v1654, 0.0
    %v1825 = vmax.f32 %v1657, 0.0
    %v1826 = vmax.f32 %v1662, 0.0
    %v1827 = vmax.f32 %v1665, 0.0
    %v1828 = vmax.f32 %v1670, 0.0
    %v1829 = vmax.f32 %v1673, 0.0
    %v1830 = vmax.f32 %v1678, 0.0
    %v1831 = vmax.f32 %v1681, 0.0
    %v1832 = vmax.f32 %v1686, 0.0
    %v1833 = vmax.f32 %v1689, 0.0
    %v1834 = vmax.f32 %v1694, 0.0
    %v1835 = vmax.f32 %v1697, 0.0
    %v1836 = vmax.f32 %v1702, 0.0
    %v1837 = vmax.f32 %v1705, 0.0
    %v1838 = vmax.f32 %v1710, 0.0
    %v1839 = vmax.f32 %v1713, 0.0
    %v1840 = vmax.f32 %v1718, 0.0
    %v1841 = vmax.f32 %v1721, 0.0
    %v1842 = vmax.f32 %v1726, 0.0
    %v1843 = vmax.f32 %v1729, 0.0
    %v1844 = vmax.f32 %v1734, 0.0
    %v1845 = vmax.f32 %v1737, 0.0
    %v1846 = vmax.f32 %v1742, 0.0
    %v1847 = vmax.f32 %v1745, 0.0
    %v1848 = vmax.f32 %v1750, 0.0
    %v1849 = vmax.f32 %v1753, 0.0
    %v1850 = vmax.f32 %v1758, 0.0
    %v1851 = vmax.f32 %v1761, 0.0
    %v1852 = vmax.f32 %v1766, 0.0
    %v1853 = vmax.f32 %v1769, 0.0
    %v1854 = vmax.f32 %v1774, 0.0
    %v1855 = vmax.f32 %v1777, 0.0
    %v1856 = vmax.f32 %v1782, 0.0
    %v1857 = vmax.f32 %v1785, 0.0
    %v1858 = vmax.f32 %v1790, 0.0
    %v1859 = vmax.f32 %v1793, 0.0
    %1860 = vmatprep.subr.mxu0 0.0
    %1861 = vmatpush1.msra.mxu0 %v1811
    %1862 = vmatprep.subr.mxu0 0.0
    %1863 = vmatpush1.msra.mxu0 %v1810
    %1864 = vmatprep.subr.mxu0 0.0
    %1865 = vmatpush1.msra.mxu0 %v1809
    %1866 = vmatprep.subr.mxu0 0.0
    %1867 = vmatpush1.msra.mxu0 %v1808
    %1868 = vmatprep.subr.mxu0 0.0
    %1869 = vmatpush1.msra.mxu0 %v1807
    %1870 = vmatprep.subr.mxu0 0.0
    %1871 = vmatpush1.msra.mxu0 %v1806
    %1872 = vmatprep.subr.mxu0 0.0
    %1873 = vmatpush1.msra.mxu0 %v1805
    %1874 = vmatprep.subr.mxu0 0.0
    %1875 = vmatpush1.msra.mxu0 %v1804
    %1876 = vmatprep.subr.mxu0 0.0
    %1877 = vmatpush1.msra.mxu0 %v1803
    %1878 = vmatprep.subr.mxu0 0.0
    %1879 = vmatpush1.msra.mxu0 %v1802
    %1880 = vmatprep.subr.mxu0 0.0
    %1881 = vmatpush1.msra.mxu0 %v1801
    %1882 = vmatprep.subr.mxu0 0.0
    %1883 = vmatpush1.msra.mxu0 %v1800
    %1884 = vmatprep.subr.mxu0 0.0
    %1885 = vmatpush1.msra.mxu0 %v1799
    %1886 = vmatprep.subr.mxu0 0.0
    %1887 = vmatpush1.msra.mxu0 %v1798
    %1888 = vmatprep.subr.mxu0 0.0
    %1889 = vmatpush1.msra.mxu0 %v1797
    %1890 = vmatprep.subr.mxu0 0.0
    %1891 = vmatpush1.msra.mxu0 %v1796
    %1892 = vmatprep.subr.mxu0 0.0
    %1893 = vmatpush2.msra.mxu0 %v1827
    %1894 = vmatprep.subr.mxu0 0.0
    %1895 = vmatpush2.msra.mxu0 %v1826
    %1896 = vmatprep.subr.mxu0 0.0
    %1897 = vmatpush2.msra.mxu0 %v1825
    %1898 = vmatprep.subr.mxu0 0.0
    %1899 = vmatpush2.msra.mxu0 %v1824
    %1900 = vmatprep.subr.mxu0 0.0
    %1901 = vmatpush2.msra.mxu0 %v1823
    %1902 = vmatprep.subr.mxu0 0.0
    %1903 = vmatpush2.msra.mxu0 %v1822
    %1904 = vmatprep.subr.mxu0 0.0
    %1905 = vmatpush2.msra.mxu0 %v1821
    %1906 = vmatprep.subr.mxu0 0.0
    %1907 = vmatpush2.msra.mxu0 %v1820
    %1908 = vmatprep.subr.mxu0 0.0
    %1909 = vmatpush2.msra.mxu0 %v1819
    %1910 = vmatprep.subr.mxu0 0.0
    %1911 = vmatpush2.msra.mxu0 %v1818
    %1912 = vmatprep.subr.mxu0 0.0
    %1913 = vmatpush2.msra.mxu0 %v1817
    %1914 = vmatprep.subr.mxu0 0.0
    %1915 = vmatpush2.msra.mxu0 %v1816
    %1916 = vmatprep.subr.mxu0 0.0
    %1917 = vmatpush2.msra.mxu0 %v1815
    %1918 = vmatprep.subr.mxu0 0.0
    %1919 = vmatpush2.msra.mxu0 %v1814
    %1920 = vmatprep.subr.mxu0 0.0
    %1921 = vmatpush2.msra.mxu0 %v1813
    %1922 = vmatprep.subr.mxu0 0.0
    %1923 = vmatpush2.msra.mxu0 %v1812
    %1924 = vmatprep.mubr.f32.mxu0 %v986
    %1925 = vmatmul.mubr.f32.gmra.mxu0 %v978
    %v1926 = vpop.f32.mrf.mxu0
    %v1927 = vadd.f32 0.0, %v1926
    %v1928 = vpop.f32.mrf.mxu0
    %1929 = vdwg.mxu0
    %1930 = vmatprep.subr.mxu0 0.0
    %1931 = vmatpush1.msra.mxu0 %v1843
    %1932 = vmatprep.subr.mxu0 0.0
    %1933 = vmatpush1.msra.mxu0 %v1842
    %1934 = vmatprep.subr.mxu0 0.0
    %1935 = vmatpush1.msra.mxu0 %v1841
    %1936 = vmatprep.subr.mxu0 0.0
    %1937 = vmatpush1.msra.mxu0 %v1840
    %1938 = vmatprep.subr.mxu0 0.0
    %1939 = vmatpush1.msra.mxu0 %v1839
    %1940 = vmatprep.subr.mxu0 0.0
    %1941 = vmatpush1.msra.mxu0 %v1838
    %1942 = vmatprep.subr.mxu0 0.0
    %1943 = vmatpush1.msra.mxu0 %v1837
    %1944 = vmatprep.subr.mxu0 0.0
    %1945 = vmatpush1.msra.mxu0 %v1836
    %1946 = vmatprep.subr.mxu0 0.0
    %1947 = vmatpush1.msra.mxu0 %v1835
    %1948 = vmatprep.subr.mxu0 0.0
    %1949 = vmatpush1.msra.mxu0 %v1834
    %1950 = vmatprep.subr.mxu0 0.0
    %1951 = vmatpush1.msra.mxu0 %v1833
    %1952 = vmatprep.subr.mxu0 0.0
    %1953 = vmatpush1.msra.mxu0 %v1832
    %1954 = vmatprep.subr.mxu0 0.0
    %1955 = vmatpush1.msra.mxu0 %v1831
    %1956 = vmatprep.subr.mxu0 0.0
    %1957 = vmatpush1.msra.mxu0 %v1830
    %1958 = vmatprep.subr.mxu0 0.0
    %1959 = vmatpush1.msra.mxu0 %v1829
    %1960 = vmatprep.subr.mxu0 0.0
    %1961 = vmatpush1.msra.mxu0 %v1828
    %1962 = vmatprep.subr.mxu0 0.0
    %1963 = vmatpush2.msra.mxu0 %v1859
    %1964 = vmatprep.subr.mxu0 0.0
    %1965 = vmatpush2.msra.mxu0 %v1858
    %1966 = vmatprep.subr.mxu0 0.0
    %1967 = vmatpush2.msra.mxu0 %v1857
    %1968 = vmatprep.subr.mxu0 0.0
    %1969 = vmatpush2.msra.mxu0 %v1856
    %1970 = vmatprep.subr.mxu0 0.0
    %1971 = vmatpush2.msra.mxu0 %v1855
    %1972 = vmatprep.subr.mxu0 0.0
    %1973 = vmatpush2.msra.mxu0 %v1854
    %1974 = vmatprep.subr.mxu0 0.0
    %1975 = vmatpush2.msra.mxu0 %v1853
    %1976 = vmatprep.subr.mxu0 0.0
    %1977 = vmatpush2.msra.mxu0 %v1852
    %1978 = vmatprep.subr.mxu0 0.0
    %1979 = vmatpush2.msra.mxu0 %v1851
    %1980 = vmatprep.subr.mxu0 0.0
    %1981 = vmatpush2.msra.mxu0 %v1850
    %1982 = vmatprep.subr.mxu0 0.0
    %1983 = vmatpush2.msra.mxu0 %v1849
    %1984 = vmatprep.subr.mxu0 0.0
    %1985 = vmatpush2.msra.mxu0 %v1848
    %1986 = vmatprep.subr.mxu0 0.0
    %1987 = vmatpush2.msra.mxu0 %v1847
    %1988 = vmatprep.subr.mxu0 0.0
    %1989 = vmatpush2.msra.mxu0 %v1846
    %1990 = vmatprep.subr.mxu0 0.0
    %1991 = vmatpush2.msra.mxu0 %v1845
    %1992 = vmatprep.subr.mxu0 0.0
    %1993 = vmatpush2.msra.mxu0 %v1844
    %1994 = vmatprep.mubr.f32.mxu0 %v987
    %1995 = vmatmul.mubr.f32.gmra.mxu0 %v985
    %v1996 = vpop.f32.mrf.mxu0
    %v1997 = vadd.f32 %v1927, %v1996
    %v1998 = vpop.f32.mrf.mxu0
    %1999 = vdwg.mxu0
    %v2000 = vpack.c.bf16 %v1997, %v1997
    %v2001 = vpack.c.bf16 %v215, %v214
    %v2002 = vpack.c.bf16 %v217, %v216
    %v2003 = vpack.c.bf16 %v219, %v218
    %v2004 = vpack.c.bf16 %v221, %v220
    %v2005 = vpack.c.bf16 %v223, %v222
    %v2006 = vpack.c.bf16 %v225, %v224
    %v2007 = vpack.c.bf16 %v227, %v226
    %v2008 = vpack.c.bf16 %v229, %v228
    %v2010 = vlaneseq
    %v2011 = vshrl.u32 %v2010, 7
    %v2012 = vsub.s32 0, %v2011
    %v2013 = vrot.slane %v233, %v2012
    %2015 = vmatprep.subr.bf16.mxu0 0
    %2016 = vmatpush1.bf16.msra.mxu0 %v2008
    %2017 = vmatprep.subr.bf16.mxu0 0
    %2018 = vmatpush1.bf16.msra.mxu0 %v2007
    %2019 = vmatprep.subr.bf16.mxu0 0
    %2020 = vmatpush1.bf16.msra.mxu0 %v2006
    %2021 = vmatprep.subr.bf16.mxu0 0
    %2022 = vmatpush1.bf16.msra.mxu0 %v2005
    %2023 = vmatprep.subr.bf16.mxu0 0
    %2024 = vmatpush1.bf16.msra.mxu0 %v2004
    %2025 = vmatprep.subr.bf16.mxu0 0
    %2026 = vmatpush1.bf16.msra.mxu0 %v2003
    %2027 = vmatprep.subr.bf16.mxu0 0
    %2028 = vmatpush1.bf16.msra.mxu0 %v2002
    %2029 = vmatprep.subr.bf16.mxu0 0
    %2030 = vmatpush1.bf16.msra.mxu0 %v2001
    %2031 = vmatprep.subr.bf16.mxu0 0
    %2032 = vmatpush2.bf16.msra.mxu0 0
    %2033 = vmatprep.subr.bf16.mxu0 0
    %2034 = vmatpush2.bf16.msra.mxu0 0
    %2035 = vmatprep.subr.bf16.mxu0 0
    %2036 = vmatpush2.bf16.msra.mxu0 0
    %2037 = vmatprep.subr.bf16.mxu0 0
    %2038 = vmatpush2.bf16.msra.mxu0 0
    %2039 = vmatprep.subr.bf16.mxu0 0
    %2040 = vmatpush2.bf16.msra.mxu0 0
    %2041 = vmatprep.subr.bf16.mxu0 0
    %2042 = vmatpush2.bf16.msra.mxu0 0
    %2043 = vmatprep.subr.bf16.mxu0 0
    %2044 = vmatpush2.bf16.msra.mxu0 0
    %2045 = vmatprep.subr.bf16.mxu0 0
    %2046 = vmatpush2.bf16.msra.mxu0 0
    %2047 = vmatprep.mubr.bf16.mxu0 0
    %2048 = vmatmul.mubr.bf16.gmra.mxu0 %v2000
    %v2049 = vpop.f32.mrf.mxu0
    %v2050 = vadd.f32 %v2013, %v2049
    %v2051 = vpop.f32.mrf.mxu0
    %v2052 = vpop.f32.mrf.mxu0
    %v2053 = vpop.f32.mrf.mxu0
    %2054 = vdwg.mxu0
    %v2055 = vmax.f32 %v2050, 0.0
    %v2056 = vpack.c.bf16 %v2055, %v2055
    %v2057 = vpack.c.bf16 %v283, %v282
    %v2058 = vpack.c.bf16 %v285, %v284
    %v2059 = vpack.c.bf16 %v287, %v286
    %v2060 = vpack.c.bf16 %v289, %v288
    %v2061 = vpack.c.bf16 %v291, %v290
    %v2062 = vpack.c.bf16 %v293, %v292
    %v2063 = vpack.c.bf16 %v295, %v294
    %v2064 = vpack.c.bf16 %v297, %v296
    %v2066 = vlaneseq
    %v2067 = vshrl.u32 %v2066, 7
    %v2068 = vsub.s32 0, %v2067
    %v2069 = vrot.slane %v301, %v2068
    %2071 = vmatprep.subr.bf16.mxu0 0
    %2072 = vmatpush1.bf16.msra.mxu0 %v2064
    %2073 = vmatprep.subr.bf16.mxu0 0
    %2074 = vmatpush1.bf16.msra.mxu0 %v2063
    %2075 = vmatprep.subr.bf16.mxu0 0
    %2076 = vmatpush1.bf16.msra.mxu0 %v2062
    %2077 = vmatprep.subr.bf16.mxu0 0
    %2078 = vmatpush1.bf16.msra.mxu0 %v2061
    %2079 = vmatprep.subr.bf16.mxu0 0
    %2080 = vmatpush1.bf16.msra.mxu0 %v2060
    %2081 = vmatprep.subr.bf16.mxu0 0
    %2082 = vmatpush1.bf16.msra.mxu0 %v2059
    %2083 = vmatprep.subr.bf16.mxu0 0
    %2084 = vmatpush1.bf16.msra.mxu0 %v2058
    %2085 = vmatprep.subr.bf16.mxu0 0
    %2086 = vmatpush1.bf16.msra.mxu0 %v2057
    %2087 = vmatprep.subr.bf16.mxu0 0
    %2088 = vmatpush2.bf16.msra.mxu0 0
    %2089 = vmatprep.subr.bf16.mxu0 0
    %2090 = vmatpush2.bf16.msra.mxu0 0
    %2091 = vmatprep.subr.bf16.mxu0 0
    %2092 = vmatpush2.bf16.msra.mxu0 0
    %2093 = vmatprep.subr.bf16.mxu0 0
    %2094 = vmatpush2.bf16.msra.mxu0 0
    %2095 = vmatprep.subr.bf16.mxu0 0
    %2096 = vmatpush2.bf16.msra.mxu0 0
    %2097 = vmatprep.subr.bf16.mxu0 0
    %2098 = vmatpush2.bf16.msra.mxu0 0
    %2099 = vmatprep.subr.bf16.mxu0 0
    %2100 = vmatpush2.bf16.msra.mxu0 0
    %2101 = vmatprep.subr.bf16.mxu0 0
    %2102 = vmatpush2.bf16.msra.mxu0 0
    %2103 = vmatprep.mubr.bf16.mxu0 0
    %2104 = vmatmul.mubr.bf16.gmra.mxu0 %v2056
    %v2105 = vpop.f32.mrf.mxu0
    %v2106 = vadd.f32 %v2069, %v2105
    %v2107 = vpop.f32.mrf.mxu0
    %v2108 = vpop.f32.mrf.mxu0
    %v2109 = vpop.f32.mrf.mxu0
    %2110 = vdwg.mxu0
    %v2111 = vmul.f32 %v1238, %v2106
    %vm2112 = vcmask 1041408
    %v2113 = vsel %vm2112, %v2111, 0.0
    %2114 = vadd.xlane.f32.xlu0 %v2113
    %v2115 = vpop.xlane.xlu0 %2114
    %v2116 = vmul.f32 %v1238, %v1238
    %v2117 = vsel %vm2112, %v2116, 0.0
    %2118 = vadd.xlane.f32.xlu0 %v2117
    %v2119 = vpop.xlane.xlu0 %2118
    %v2120 = vrsqrt.pop %v2119
    %v2121 = vmul.f32 %v2119, %v2120
    %vm2122 = vcmp.eq.f32.partialorder %v2119, inf
    %v2123 = vsel %vm2122, %v2119, %v2121
    %vm2124 = vcmp.eq.f32.partialorder %v2119, 0.0
    %v2125 = vand.u32 %v2119, 2147483648
    %v2126 = vsel %vm2124, %v2125, %v2123
    %v2127 = vmul.f32 %v2106, %v2106
    %v2128 = vsel %vm2112, %v2127, 0.0
    %2129 = vadd.xlane.f32.xlu0 %v2128
    %v2130 = vpop.xlane.xlu0 %2129
    %v2131 = vrsqrt.pop %v2130
    %v2132 = vmul.f32 %v2130, %v2131
    %vm2133 = vcmp.eq.f32.partialorder %v2130, inf
    %v2134 = vsel %vm2133, %v2130, %v2132
    %vm2135 = vcmp.eq.f32.partialorder %v2130, 0.0
    %v2136 = vand.u32 %v2130, 2147483648
    %v2137 = vsel %vm2135, %v2136, %v2134
    %v2138 = vmax.f32 %v2126, 1e-08
    %v2139 = vmax.f32 %v2137, 1e-08
    %v2140 = vmul.f32 %v2138, %v2139
    %v2141 = vrcp.pop %v2140
    %v2142 = vmul.f32 %v2115, %v2141
    %v2143 = vsel %vm2112, %v2142, 0.0
    %v2144 = vrot.slane %v2143, 4
    %v2145 = vadd.f32 %v2143, %v2144
    %v2146 = vrot.slane %v2145, 2
    %v2147 = vadd.f32 %v2145, %v2146
    %v2148 = vrot.slane %v2147, 1
    %v2149 = vadd.f32 %v2147, %v2148
    %v2150 = vrcp.pop 2.0
    %v2151 = vmul.f32 %v2149, %v2150
    %v2152 = vsub.f32 0.0, %v2151
    %v2153 = vmul.f32 %v2152, 0.5
    %2154 = vst [vmem:[#allocation2] sm:$0x1] %v2153
    // Predicated region
    $region54: #{byol_forward.1} parent=1 // pred_check
      _
    $region55: #{byol_forward.1} parent=1 // pred_check_branch
      %2156 = sbr.rel (0) target = $region57
    $region56: #{byol_forward.1} parent=1 // pred_region
      %s2158 = ssub.s32 16, 16
      %2159 = vsyncadd [#allocation3], %s2158
      %s2161 = sshll.u32 [#allocation2], 4
      %s2162 = int_to_ptr.vmem [resolvable:$true] %s2161
      %2164 = dma.vmem_to_hbm [thread:$0]  %s2162, 16, %s13, [#allocation3]
    $region57: #{byol_forward.1} parent=1 // pred_fallthru
      _
    // Predicated region
    $region58: #{byol_forward.1} parent=1 // pred_check
      _
    $region59: #{byol_forward.1} parent=1 // pred_check_branch
      %2166 = sbr.rel (0) target = $region61
    $region60: #{byol_forward.1} parent=1 // pred_region
      _
    $region61: #{byol_forward.1} parent=1 // pred_fallthru
      _
    // Predicated region
    $region62: #{byol_forward.1} parent=1 // pred_check
      _
    $region63: #{byol_forward.1} parent=1 // pred_check_branch
      %2168 = sbr.rel (0) target = $region65
    $region64: #{byol_forward.1} parent=1 // pred_region
      _
    $region65: #{byol_forward.1} parent=1 // pred_fallthru
      _
    // Predicated region
    $region66: #{byol_forward.1} parent=1 // pred_check
      _
    $region67: #{byol_forward.1} parent=1 // pred_check_branch
      %2170 = sbr.rel (0) target = $region69
    $region68: #{byol_forward.1} parent=1 // pred_region
      _
    $region69: #{byol_forward.1} parent=1 // pred_fallthru
      _
    // Predicated region
    $region70: #{byol_forward.1} parent=1 // pred_check
      _
    $region71: #{byol_forward.1} parent=1 // pred_check_branch
      %2172 = sbr.rel (0) target = $region73
    $region72: #{byol_forward.1} parent=1 // pred_region
      _
    $region73: #{byol_forward.1} parent=1 // pred_fallthru
      _
    // Predicated region
    $region74: #{byol_forward.1} parent=1 // pred_check
      _
    $region75: #{byol_forward.1} parent=1 // pred_check_branch
      %2174 = sbr.rel (0) target = $region77
    $region76: #{byol_forward.1} parent=1 // pred_region
      _
    $region77: #{byol_forward.1} parent=1 // pred_fallthru
      _
    // Predicated region
    $region78: #{byol_forward.1} parent=1 // pred_check
      _
    $region79: #{byol_forward.1} parent=1 // pred_check_branch
      %2176 = sbr.rel (0) target = $region81
    $region80: #{byol_forward.1} parent=1 // pred_region
      %2177 = dma.done [#allocation3], 16
    $region81: #{byol_forward.1} parent=1 // pred_fallthru
      _
    // Predicated region
    $region82: #{byol_forward.1} parent=1 // pred_check
      _
    $region83: #{byol_forward.1} parent=1 // pred_check_branch
      %2179 = sbr.rel (0) target = $region85
    $region84: #{byol_forward.1} parent=1 // pred_region
      _
    $region85: #{byol_forward.1} parent=1 // pred_fallthru
      _
    // Predicated region
    $region86: #{byol_forward.1} parent=1 // pred_check
      _
    $region87: #{byol_forward.1} parent=1 // pred_check_branch
      %2181 = sbr.rel (0) target = $region89
    $region88: #{byol_forward.1} parent=1 // pred_region
      _
    $region89: #{byol_forward.1} parent=1 // pred_fallthru
      _
    // Predicated region
    $region90: #{byol_forward.1} parent=1 // pred_check
      _
    $region91: #{byol_forward.1} parent=1 // pred_check_branch
      %2183 = sbr.rel (0) target = $region93
    $region92: #{byol_forward.1} parent=1 // pred_region
      _
    $region93: #{byol_forward.1} parent=1 // pred_fallthru
      _
    // Predicated region
    $region94: #{byol_forward.1} parent=1 // pred_check
      _
    $region95: #{byol_forward.1} parent=1 // pred_check_branch
      %2185 = sbr.rel (0) target = $region97
    $region96: #{byol_forward.1} parent=1 // pred_region
      _
    $region97: #{byol_forward.1} parent=1 // pred_fallthru
      _
    // Predicated region
    $region98: #{byol_forward.1} parent=1 // pred_check
      _
    $region99: #{byol_forward.1} parent=1 // pred_check_branch
      %2187 = sbr.rel (0) target = $region101
    $region100: #{byol_forward.1} parent=1 // pred_region
      _
    $region101: #{byol_forward.1} parent=1 // pred_fallthru
      _
    %2188 = vsyncpa [#allocation3], 1

</llo_original>
